<compile_context>
chip_gen: v5e
topology: v5e:2x2
jax: 0.10.0
libtpu: 0.0.40
codegen_flags: <defaults>
</compile_context>

<pallas_src>
import functools

import jax
import jax.numpy as jnp
from jax.experimental import pallas as pl
from jax.experimental.pallas import tpu as pltpu

BN_EPS = 1e-5


def _round_up(x, m):
    return (x + m - 1) // m * m


# ---------------------------------------------------------------------------
# Pass 1: conv matmul + bias, plus per-tile BatchNorm partial statistics.
# ---------------------------------------------------------------------------
def _conv_stats_kernel(a_ref, w_ref, b_ref, o_ref, sum_ref, ssq_ref, *, m_total):
    # a_ref:   (TM, KKCp)  im2col patch tile (bf16 or f32)
    # w_ref:   (KKCp, Cp)  reshaped conv weight (resident across the grid)
    # b_ref:   (1, Cp)     conv bias (f32)
    # o_ref:   (TM, Cp)    conv + bias output tile (f32)
    # sum_ref: (8, Cp)     per-tile partial channel sum (row 0 meaningful)
    # ssq_ref: (8, Cp)     per-tile partial channel sum-of-squares
    i = pl.program_id(0)
    tm, cp = o_ref.shape

    acc = jnp.dot(a_ref[...], w_ref[...], preferred_element_type=jnp.float32)
    acc = acc + b_ref[...]
    o_ref[...] = acc.astype(o_ref.dtype)

    # Mask out rows that only exist because M was padded up to a tile multiple,
    # so they do not pollute the BatchNorm batch statistics.
    row = jax.lax.broadcasted_iota(jnp.int32, (tm, 1), 0) + i * tm
    mask = (row < m_total).astype(jnp.float32)
    am = acc * mask
    part_sum = jnp.sum(am, axis=0, keepdims=True)        # (1, Cp)  XLU reduce
    part_ssq = jnp.sum(am * acc, axis=0, keepdims=True)   # mask*acc^2 (mask in {0,1})

    # Per-tile partials instead of a carried accumulator keep the grid axis
    # fully 'parallel'; blocks are (8, Cp) to stay (8, 128)-tile aligned.
    sum_ref[...] = jnp.broadcast_to(part_sum, (8, cp))
    ssq_ref[...] = jnp.broadcast_to(part_ssq, (8, cp))


# ---------------------------------------------------------------------------
# Pass 2: apply folded BatchNorm: y * scale + shift   (all f32).
# ---------------------------------------------------------------------------
def _bn_apply_kernel(y_ref, scale_ref, shift_ref, o_ref):
    o_ref[...] = (y_ref[...] * scale_ref[...] + shift_ref[...]).astype(o_ref.dtype)


def _im2col_nhwc(x_nhwc, kernel_size, stride, padding, dilation):
    """Glue: extract conv patches -> (N*Ho*Wo, K*K*Cin)."""
    n, h, w, cin = x_nhwc.shape
    k = kernel_size
    xp = jnp.pad(x_nhwc, ((0, 0), (padding, padding), (padding, padding), (0, 0)))
    ho = (h + 2 * padding - dilation * (k - 1) - 1) // stride + 1
    wo = (w + 2 * padding - dilation * (k - 1) - 1) // stride + 1
    cols = []
    for kh in range(k):
        for kw in range(k):
            patch = xp[
                :,
                kh * dilation : kh * dilation + (ho - 1) * stride + 1 : stride,
                kw * dilation : kw * dilation + (wo - 1) * stride + 1 : stride,
                :,
            ]
            cols.append(patch.reshape(n * ho * wo, cin))
    return jnp.concatenate(cols, axis=1), ho, wo


@functools.partial(
    jax.jit,
    static_argnames=("kernel_size", "stride", "padding", "dilation", "block_m", "compute_dtype"),
)
def basic_conv2d(x_nchw, conv_w, conv_b, bn_gamma, bn_beta, *,
                 kernel_size, stride=1, padding=0, dilation=1,
                 block_m=512, compute_dtype=jnp.bfloat16):
    """Forward of BasicConv2d. x_nchw: (N, Cin, H, W) -> (N, Cout, Ho, Wo)."""
    n, cin, h, w = x_nchw.shape
    cout = conv_w.shape[0]
    k = kernel_size

    x_nhwc = jnp.transpose(x_nchw, (0, 2, 3, 1))
    patches, ho, wo = _im2col_nhwc(x_nhwc, k, stride, padding, dilation)  # (M, K*K*Cin)
    m = n * ho * wo
    kkc = k * k * cin

    # Lane-dense / MXU-friendly padding.
    cp = _round_up(cout, 128)          # output channels  -> x128 lanes
    kkc_p = _round_up(kkc, 128)        # contraction dim  -> x128
    tm = min(block_m, _round_up(m, 8)) # row tile (multiple of 8 sublanes)
    m_p = _round_up(m, tm)
    nt = m_p // tm

    patches = jnp.pad(patches, ((0, m_p - m), (0, kkc_p - kkc))).astype(compute_dtype)

    # PyTorch conv weight (Cout, Cin, K, K) -> (K, K, Cin, Cout) -> (K*K*Cin, Cout)
    # to match the (kh, kw, cin) ordering of the im2col columns.
    w2d = jnp.transpose(conv_w, (2, 3, 1, 0)).reshape(kkc, cout)
    w2d = jnp.pad(w2d, ((0, kkc_p - kkc), (0, cp - cout))).astype(compute_dtype)
    b2d = jnp.pad(conv_b.astype(jnp.float32), (0, cp - cout)).reshape(1, cp)

    itemsize = jnp.dtype(compute_dtype).itemsize
    cost1 = pl.CostEstimate(
        flops=2 * m_p * kkc_p * cp,
        transcendentals=0,
        bytes_accessed=m_p * kkc_p * itemsize + kkc_p * cp * itemsize
                       + (m_p * cp + 2 * nt * 8 * cp + cp) * 4,
    )

    conv_out, sums8, ssqs8 = pl.pallas_call(
        functools.partial(_conv_stats_kernel, m_total=m),
        grid=(nt,),
        in_specs=[
            pl.BlockSpec((tm, kkc_p), lambda i: (i, 0)),   # patch tile (pipelined)
            pl.BlockSpec((kkc_p, cp), lambda i: (0, 0)),   # weight, resident
            pl.BlockSpec((1, cp), lambda i: (0, 0)),       # bias, resident
        ],
        out_specs=[
            pl.BlockSpec((tm, cp), lambda i: (i, 0)),      # conv + bias tile
            pl.BlockSpec((8, cp), lambda i: (i, 0)),       # partial sums
            pl.BlockSpec((8, cp), lambda i: (i, 0)),       # partial sum-of-squares
        ],
        out_shape=[
            jax.ShapeDtypeStruct((m_p, cp), jnp.float32),
            jax.ShapeDtypeStruct((nt * 8, cp), jnp.float32),
            jax.ShapeDtypeStruct((nt * 8, cp), jnp.float32),
        ],
        compiler_params=pltpu.CompilerParams(dimension_semantics=("parallel",)),
        cost_estimate=cost1,
    )(patches, w2d, b2d)

    # Finalize BatchNorm statistics on tiny (Cp,) vectors (plain JAX glue).
    sums = jnp.sum(sums8.reshape(nt, 8, cp)[:, 0, :], axis=0)
    ssqs = jnp.sum(ssqs8.reshape(nt, 8, cp)[:, 0, :], axis=0)
    mean = sums / m
    # sumsq/M - mean^2; clamp against tiny negative values from fp cancellation.
    var = jnp.maximum(ssqs / m - mean * mean, 0.0)
    inv = jax.lax.rsqrt(var + BN_EPS)
    gamma_p = jnp.pad(bn_gamma.astype(jnp.float32), (0, cp - cout))
    beta_p = jnp.pad(bn_beta.astype(jnp.float32), (0, cp - cout))
    scale = (gamma_p * inv).reshape(1, cp)
    shift = (beta_p - mean * gamma_p * inv).reshape(1, cp)

    out2d = pl.pallas_call(
        _bn_apply_kernel,
        grid=(nt,),
        in_specs=[
            pl.BlockSpec((tm, cp), lambda i: (i, 0)),
            pl.BlockSpec((1, cp), lambda i: (0, 0)),
            pl.BlockSpec((1, cp), lambda i: (0, 0)),
        ],
        out_specs=pl.BlockSpec((tm, cp), lambda i: (i, 0)),
        out_shape=jax.ShapeDtypeStruct((m_p, cp), jnp.float32),
        compiler_params=pltpu.CompilerParams(dimension_semantics=("parallel",)),
    )(conv_out, scale, shift)

    out = out2d[:m, :cout].reshape(n, ho, wo, cout)
    return jnp.transpose(out, (0, 3, 1, 2)).astype(x_nchw.dtype)  # back to NCHW


def _reference(x_nchw, conv_w, conv_b, bn_gamma, bn_beta, *, stride, padding, dilation):
    """Pure-JAX reference matching PyTorch semantics (conv + training-mode BN)."""
    y = jax.lax.conv_general_dilated(
        x_nchw, conv_w,
        window_strides=(stride, stride),
        padding=((padding, padding), (padding, padding)),
        rhs_dilation=(dilation, dilation),
        dimension_numbers=("NCHW", "OIHW", "NCHW"),
    )
    y = y + conv_b.reshape(1, -1, 1, 1)
    mean = jnp.mean(y, axis=(0, 2, 3), keepdims=True)
    var = jnp.mean((y - mean) ** 2, axis=(0, 2, 3), keepdims=True)
    y = (y - mean) * jax.lax.rsqrt(var + BN_EPS)
    return y * bn_gamma.reshape(1, -1, 1, 1) + bn_beta.reshape(1, -1, 1, 1)


if __name__ == "__main__":
    # BasicConv2d(in_planes=4, out_planes=8, kernel_size=3, padding=1) at small shapes.
    N, Cin, H, W = 2, 4, 16, 16
    Cout, K, stride, padding, dilation = 8, 3, 1, 1, 1

    key = jax.random.PRNGKey(0)
    kx, kw, kb, kg, kbeta = jax.random.split(key, 5)

    x = jax.random.normal(kx, (N, Cin, H, W), dtype=jnp.float32)
    conv_w = jax.random.normal(kw, (Cout, Cin, K, K), dtype=jnp.float32) * 0.1
    conv_b = jax.random.normal(kb, (Cout,), dtype=jnp.float32) * 0.1
    bn_gamma = 1.0 + 0.1 * jax.random.normal(kg, (Cout,), dtype=jnp.float32)
    bn_beta = 0.1 * jax.random.normal(kbeta, (Cout,), dtype=jnp.float32)

    ref = _reference(x, conv_w, conv_b, bn_gamma, bn_beta,
                     stride=stride, padding=padding, dilation=dilation)

    # Performance path: bf16 MXU inputs, f32 accumulation / BN math.
    out_bf16 = basic_conv2d(x, conv_w, conv_b, bn_gamma, bn_beta,
                            kernel_size=K, stride=stride, padding=padding,
                            dilation=dilation, compute_dtype=jnp.bfloat16)
    out_bf16 = jax.block_until_ready(out_bf16)
    assert out_bf16.shape == (N, Cout, H, W), out_bf16.shape
    assert jnp.allclose(out_bf16, ref, atol=5e-2, rtol=5e-2), \
        float(jnp.max(jnp.abs(out_bf16 - ref)))

    # Exact-semantics check: f32 MXU inputs, tight tolerance.
    out_f32 = basic_conv2d(x, conv_w, conv_b, bn_gamma, bn_beta,
                           kernel_size=K, stride=stride, padding=padding,
                           dilation=dilation, compute_dtype=jnp.float32)
    out_f32 = jax.block_until_ready(out_f32)
    assert jnp.allclose(out_f32, ref, atol=1e-3, rtol=1e-3), \
        float(jnp.max(jnp.abs(out_f32 - ref)))

    print("KERNEL_OK")
</pallas_src>

<mosaic_0001>
module attributes {stable_mosaic.version = 11 : i64} {
  func.func @_bn_apply_kernel(%arg0: i32, %arg1: memref<512x128xf32, #tpu.memory_space<vmem>>, %arg2: memref<1x128xf32, #tpu.memory_space<vmem>>, %arg3: memref<1x128xf32, #tpu.memory_space<vmem>>, %arg4: memref<512x128xf32, #tpu.memory_space<vmem>>) attributes {dimension_semantics = [#tpu.dimension_semantics<parallel>], iteration_bounds = array<i64: 1>, scalar_prefetch = 0 : i64, scratch_operands = 0 : i64, tpu.core_type = #tpu.core_type<tc>, window_params = [{transform_indices = @transform_0, window_bounds = array<i64: 512, 128>}, {pipeline_mode = #tpu.pipeline_mode<synchronous>, transform_indices = @transform_1, window_bounds = array<i64: 1, 128>}, {pipeline_mode = #tpu.pipeline_mode<synchronous>, transform_indices = @transform_2, window_bounds = array<i64: 1, 128>}, {transform_indices = @transform_3, window_bounds = array<i64: 512, 128>}]} {
    %c0 = arith.constant 0 : index
    %c0_0 = arith.constant 0 : index
    %0 = vector.load %arg1[%c0, %c0_0] : memref<512x128xf32, #tpu.memory_space<vmem>>, vector<512x128xf32>
    %c0_1 = arith.constant 0 : index
    %c0_2 = arith.constant 0 : index
    %1 = vector.load %arg2[%c0_1, %c0_2] : memref<1x128xf32, #tpu.memory_space<vmem>>, vector<1x128xf32>
    %2 = vector.broadcast %1 : vector<1x128xf32> to vector<512x128xf32>
    %3 = arith.mulf %0, %2 : vector<512x128xf32>
    %c0_3 = arith.constant 0 : index
    %c0_4 = arith.constant 0 : index
    %4 = vector.load %arg3[%c0_3, %c0_4] : memref<1x128xf32, #tpu.memory_space<vmem>>, vector<1x128xf32>
    %5 = vector.broadcast %4 : vector<1x128xf32> to vector<512x128xf32>
    %6 = arith.addf %3, %5 : vector<512x128xf32>
    %c0_5 = arith.constant 0 : index
    %c0_6 = arith.constant 0 : index
    %7 = vector.load %arg4[%c0_5, %c0_6] : memref<512x128xf32, #tpu.memory_space<vmem>>, vector<512x128xf32>
    tpu.vector_store %arg4[%c0_5, %c0_6], %6 {strides = array<i32>} : memref<512x128xf32, #tpu.memory_space<vmem>>, vector<512x128xf32>,
    return
  }
  func.func @transform_0(%arg0: i32) -> (i32, i32) {
    %c0_i32 = arith.constant 0 : i32
    %c0_i32_0 = arith.constant 0 : i32
    return %arg0, %c0_i32 : i32, i32
  }
  func.func @transform_1(%arg0: i32) -> (i32, i32) {
    %c0_i32 = arith.constant 0 : i32
    %c0_i32_0 = arith.constant 0 : i32
    %c0_i32_1 = arith.constant 0 : i32
    return %c0_i32, %c0_i32_0 : i32, i32
  }
  func.func @transform_2(%arg0: i32) -> (i32, i32) {
    %c0_i32 = arith.constant 0 : i32
    %c0_i32_0 = arith.constant 0 : i32
    %c0_i32_1 = arith.constant 0 : i32
    return %c0_i32, %c0_i32_0 : i32, i32
  }
  func.func @transform_3(%arg0: i32) -> (i32, i32) {
    %c0_i32 = arith.constant 0 : i32
    %c0_i32_0 = arith.constant 0 : i32
    return %arg0, %c0_i32 : i32, i32
  }
}

module attributes {stable_mosaic.version = 11 : i64} {
  func.func @_conv_stats_kernel(%arg0: i32, %arg1: memref<512x128xbf16, #tpu.memory_space<vmem>>, %arg2: memref<128x128xbf16, #tpu.memory_space<vmem>>, %arg3: memref<1x128xf32, #tpu.memory_space<vmem>>, %arg4: memref<512x128xf32, #tpu.memory_space<vmem>>, %arg5: memref<8x128xf32, #tpu.memory_space<vmem>>, %arg6: memref<8x128xf32, #tpu.memory_space<vmem>>) attributes {dimension_semantics = [#tpu.dimension_semantics<parallel>], iteration_bounds = array<i64: 1>, scalar_prefetch = 0 : i64, scratch_operands = 0 : i64, tpu.core_type = #tpu.core_type<tc>, window_params = [{transform_indices = @transform_0, window_bounds = array<i64: 512, 128>}, {pipeline_mode = #tpu.pipeline_mode<synchronous>, transform_indices = @transform_1, window_bounds = array<i64: 128, 128>}, {pipeline_mode = #tpu.pipeline_mode<synchronous>, transform_indices = @transform_2, window_bounds = array<i64: 1, 128>}, {transform_indices = @transform_3, window_bounds = array<i64: 512, 128>}, {transform_indices = @transform_4, window_bounds = array<i64: 8, 128>}, {transform_indices = @transform_5, window_bounds = array<i64: 8, 128>}]} {
    %c0 = arith.constant 0 : index
    %c0_0 = arith.constant 0 : index
    %0 = vector.load %arg1[%c0, %c0_0] : memref<512x128xbf16, #tpu.memory_space<vmem>>, vector<512x128xbf16>
    %c0_1 = arith.constant 0 : index
    %c0_2 = arith.constant 0 : index
    %1 = vector.load %arg2[%c0_1, %c0_2] : memref<128x128xbf16, #tpu.memory_space<vmem>>, vector<128x128xbf16>
    %cst = arith.constant dense<0.000000e+00> : vector<512x128xf32>
    %2 = tpu.matmul %0, %1, %cst {dimension_numbers = #tpu.dot_dimension_numbers<[1], [0], [0], [1], [0, 0, 1, 1], [], []>} : vector<512x128xbf16>, vector<128x128xbf16>, vector<512x128xf32> -> vector<512x128xf32>
    %c0_3 = arith.constant 0 : index
    %c0_4 = arith.constant 0 : index
    %3 = vector.load %arg3[%c0_3, %c0_4] : memref<1x128xf32, #tpu.memory_space<vmem>>, vector<1x128xf32>
    %4 = vector.broadcast %3 : vector<1x128xf32> to vector<512x128xf32>
    %5 = arith.addf %2, %4 : vector<512x128xf32>
    %c0_5 = arith.constant 0 : index
    %c0_6 = arith.constant 0 : index
    %6 = vector.load %arg4[%c0_5, %c0_6] : memref<512x128xf32, #tpu.memory_space<vmem>>, vector<512x128xf32>
    tpu.vector_store %arg4[%c0_5, %c0_6], %5 {strides = array<i32>} : memref<512x128xf32, #tpu.memory_space<vmem>>, vector<512x128xf32>,
    %7 = tpu.iota {dimensions = array<i32: 0>} : vector<512x1xi32>
    %c512_i32 = arith.constant 512 : i32
    %8 = arith.muli %arg0, %c512_i32 : i32
    %9 = vector.broadcast %8 : i32 to vector<512x1xi32>
    %10 = arith.addi %7, %9 : vector<512x1xi32>
    %c512_i32_7 = arith.constant 512 : i32
    %11 = vector.broadcast %c512_i32_7 : i32 to vector<512x1xi32>
    %12 = arith.cmpi slt, %10, %11 : vector<512x1xi32>
    %13 = arith.extui %12 : vector<512x1xi1> to vector<512x1xi32>
    %14 = arith.sitofp %13 : vector<512x1xi32> to vector<512x1xf32>
    %15 = vector.broadcast %14 : vector<512x1xf32> to vector<512x128xf32>
    %16 = arith.mulf %5, %15 : vector<512x128xf32>
    %cst_8 = arith.constant dense<0.000000e+00> : vector<128xf32>
    %17 = vector.multi_reduction <add>, %16, %cst_8 [0] : vector<512x128xf32> to vector<128xf32>
    %18 = vector.shape_cast %17 : vector<128xf32> to vector<1x128xf32>
    %19 = arith.mulf %16, %5 : vector<512x128xf32>
    %cst_9 = arith.constant dense<0.000000e+00> : vector<128xf32>
    %20 = vector.multi_reduction <add>, %19, %cst_9 [0] : vector<512x128xf32> to vector<128xf32>
    %21 = vector.shape_cast %20 : vector<128xf32> to vector<1x128xf32>
    %22 = vector.shape_cast %18 : vector<1x128xf32> to vector<1x128xf32>
    %23 = vector.broadcast %22 : vector<1x128xf32> to vector<8x128xf32>
    %c0_10 = arith.constant 0 : index
    %c0_11 = arith.constant 0 : index
    %24 = vector.load %arg5[%c0_10, %c0_11] : memref<8x128xf32, #tpu.memory_space<vmem>>, vector<8x128xf32>
    tpu.vector_store %arg5[%c0_10, %c0_11], %23 {strides = array<i32>} : memref<8x128xf32, #tpu.memory_space<vmem>>, vector<8x128xf32>,
    %25 = vector.shape_cast %21 : vector<1x128xf32> to vector<1x128xf32>
    %26 = vector.broadcast %25 : vector<1x128xf32> to vector<8x128xf32>
    %c0_12 = arith.constant 0 : index
    %c0_13 = arith.constant 0 : index
    %27 = vector.load %arg6[%c0_12, %c0_13] : memref<8x128xf32, #tpu.memory_space<vmem>>, vector<8x128xf32>
    tpu.vector_store %arg6[%c0_12, %c0_13], %26 {strides = array<i32>} : memref<8x128xf32, #tpu.memory_space<vmem>>, vector<8x128xf32>,
    return
  }
  func.func @transform_0(%arg0: i32) -> (i32, i32) {
    %c0_i32 = arith.constant 0 : i32
    %c0_i32_0 = arith.constant 0 : i32
    return %arg0, %c0_i32 : i32, i32
  }
  func.func @transform_1(%arg0: i32) -> (i32, i32) {
    %c0_i32 = arith.constant 0 : i32
    %c0_i32_0 = arith.constant 0 : i32
    %c0_i32_1 = arith.constant 0 : i32
    return %c0_i32, %c0_i32_0 : i32, i32
  }
  func.func @transform_2(%arg0: i32) -> (i32, i32) {
    %c0_i32 = arith.constant 0 : i32
    %c0_i32_0 = arith.constant 0 : i32
    %c0_i32_1 = arith.constant 0 : i32
    return %c0_i32, %c0_i32_0 : i32, i32
  }
  func.func @transform_3(%arg0: i32) -> (i32, i32) {
    %c0_i32 = arith.constant 0 : i32
    %c0_i32_0 = arith.constant 0 : i32
    return %arg0, %c0_i32 : i32, i32
  }
  func.func @transform_4(%arg0: i32) -> (i32, i32) {
    %c0_i32 = arith.constant 0 : i32
    %c0_i32_0 = arith.constant 0 : i32
    return %arg0, %c0_i32 : i32, i32
  }
  func.func @transform_5(%arg0: i32) -> (i32, i32) {
    %c0_i32 = arith.constant 0 : i32
    %c0_i32_0 = arith.constant 0 : i32
    return %arg0, %c0_i32 : i32, i32
  }
}

</mosaic_0001>

<llo_original>
// kernel: basic_conv2d.3
$region0: #{basic_conv2d.3}
  #allocation0 [shape = 'u32[]', space=smem, size = 0x4, offset = 0x4, fixed_abs, tag = 'smem constant byte address 0x4 - core index']
  #allocation1 [shape = 'u32[72,128]{1,0:T(1,128)}', space=vmem, size = 0x9000, scoped, tag = 'internal scratch']
  %s0 = inlined_call_operand.vmem [shape: f32[512,128], index: 0, kind: input, shape index: {}]
  %s1 = inlined_call_operand.vmem [shape: f32[1,128], index: 1, kind: input, shape index: {}]
  %s2 = inlined_call_operand.vmem [shape: f32[1,128], index: 2, kind: input, shape index: {}]
  %s3 = inlined_call_operand.vmem [shape: f32[512,128], index: 3, kind: output, shape index: {}]
  %s4 = sld [smem:[#allocation0]]
  $region22: #{basic_conv2d.3} parent=0
    _
  %s6 = ssub.s32 1, %s4
  %s7 = scalar_select 0, %s6, %s4
  // Predicated region
  $region2: #{basic_conv2d.3} parent=0 // pred_check
    _
  $region3: #{basic_conv2d.3} parent=0 // pred_check_branch
    %9 = sbr.rel (0) target = $region5
  $region4: #{basic_conv2d.3} parent=0 // pred_region
    _
  $region5: #{basic_conv2d.3} parent=0 // pred_fallthru
    _
  // Predicated region
  $region6: #{basic_conv2d.3} parent=0 // pred_check
    _
  $region7: #{basic_conv2d.3} parent=0 // pred_check_branch
    %11 = sbr.rel (0) target = $region9
  $region8: #{basic_conv2d.3} parent=0 // pred_region
    _
  $region9: #{basic_conv2d.3} parent=0 // pred_fallthru
    _
  // Predicated region
  $region10: #{basic_conv2d.3} parent=0 // pred_check
    _
  $region11: #{basic_conv2d.3} parent=0 // pred_check_branch
    %13 = sbr.rel (0) target = $region13
  $region12: #{basic_conv2d.3} parent=0 // pred_region
    _
  $region13: #{basic_conv2d.3} parent=0 // pred_fallthru
    _
  %v14 = vld [vmem:[%s0] sm:$0xff]
  %v15 = vld [vmem:[%s0 + $0x8] sm:$0xff]
  %v16 = vld [vmem:[%s0 + $0x10] sm:$0xff]
  %v17 = vld [vmem:[%s0 + $0x18] sm:$0xff]
  %v18 = vld [vmem:[%s0 + $0x20] sm:$0xff]
  %v19 = vld [vmem:[%s0 + $0x28] sm:$0xff]
  %v20 = vld [vmem:[%s0 + $0x30] sm:$0xff]
  %v21 = vld [vmem:[%s0 + $0x38] sm:$0xff]
  %v22 = vld [vmem:[%s0 + $0x40] sm:$0xff]
  %v23 = vld [vmem:[%s0 + $0x48] sm:$0xff]
  %v24 = vld [vmem:[%s0 + $0x50] sm:$0xff]
  %v25 = vld [vmem:[%s0 + $0x58] sm:$0xff]
  %v26 = vld [vmem:[%s0 + $0x60] sm:$0xff]
  %v27 = vld [vmem:[%s0 + $0x68] sm:$0xff]
  %v28 = vld [vmem:[%s0 + $0x70] sm:$0xff]
  %v29 = vld [vmem:[%s0 + $0x78] sm:$0xff]
  %v30 = vld [vmem:[%s0 + $0x80] sm:$0xff]
  %v31 = vld [vmem:[%s0 + $0x88] sm:$0xff]
  %v32 = vld [vmem:[%s0 + $0x90] sm:$0xff]
  %v33 = vld [vmem:[%s0 + $0x98] sm:$0xff]
  %v34 = vld [vmem:[%s0 + $0xa0] sm:$0xff]
  %v35 = vld [vmem:[%s0 + $0xa8] sm:$0xff]
  %v36 = vld [vmem:[%s0 + $0xb0] sm:$0xff]
  %v37 = vld [vmem:[%s0 + $0xb8] sm:$0xff]
  %v38 = vld [vmem:[%s0 + $0xc0] sm:$0xff]
  %v39 = vld [vmem:[%s0 + $0xc8] sm:$0xff]
  %v40 = vld [vmem:[%s0 + $0xd0] sm:$0xff]
  %v41 = vld [vmem:[%s0 + $0xd8] sm:$0xff]
  %v42 = vld [vmem:[%s0 + $0xe0] sm:$0xff]
  %v43 = vld [vmem:[%s0 + $0xe8] sm:$0xff]
  %v44 = vld [vmem:[%s0 + $0xf0] sm:$0xff]
  %v45 = vld [vmem:[%s0 + $0xf8] sm:$0xff]
  %v46 = vld [vmem:[%s0 + $0x100] sm:$0xff]
  %v47 = vld [vmem:[%s0 + $0x108] sm:$0xff]
  %v48 = vld [vmem:[%s0 + $0x110] sm:$0xff]
  %v49 = vld [vmem:[%s0 + $0x118] sm:$0xff]
  %v50 = vld [vmem:[%s0 + $0x120] sm:$0xff]
  %v51 = vld [vmem:[%s0 + $0x128] sm:$0xff]
  %v52 = vld [vmem:[%s0 + $0x130] sm:$0xff]
  %v53 = vld [vmem:[%s0 + $0x138] sm:$0xff]
  %v54 = vld [vmem:[%s0 + $0x140] sm:$0xff]
  %v55 = vld [vmem:[%s0 + $0x148] sm:$0xff]
  %v56 = vld [vmem:[%s0 + $0x150] sm:$0xff]
  %v57 = vld [vmem:[%s0 + $0x158] sm:$0xff]
  %v58 = vld [vmem:[%s0 + $0x160] sm:$0xff]
  %v59 = vld [vmem:[%s0 + $0x168] sm:$0xff]
  %v60 = vld [vmem:[%s0 + $0x170] sm:$0xff]
  %v61 = vld [vmem:[%s0 + $0x178] sm:$0xff]
  %v62 = vld [vmem:[%s0 + $0x180] sm:$0xff]
  %v63 = vld [vmem:[%s0 + $0x188] sm:$0xff]
  %v64 = vld [vmem:[%s0 + $0x190] sm:$0xff]
  %v65 = vld [vmem:[%s0 + $0x198] sm:$0xff]
  %v66 = vld [vmem:[%s0 + $0x1a0] sm:$0xff]
  %v67 = vld [vmem:[%s0 + $0x1a8] sm:$0xff]
  %v68 = vld [vmem:[%s0 + $0x1b0] sm:$0xff]
  %v69 = vld [vmem:[%s0 + $0x1b8] sm:$0xff]
  %v70 = vld [vmem:[%s0 + $0x1c0] sm:$0xff]
  %v71 = vld [vmem:[%s0 + $0x1c8] sm:$0xff]
  %v72 = vld [vmem:[%s0 + $0x1d0] sm:$0xff]
  %v73 = vld [vmem:[%s0 + $0x1d8] sm:$0xff]
  %v74 = vld [vmem:[%s0 + $0x1e0] sm:$0xff]
  %v75 = vld [vmem:[%s0 + $0x1e8] sm:$0xff]
  %v76 = vld [vmem:[%s0 + $0x1f0] sm:$0xff]
  %v77 = vld [vmem:[%s0 + $0x1f8] sm:$0xff]
  %v78 = vld [vmem:[%s1] sm:$0x1]
  %v80 = vperm.slane %v78, 0
  %v82 = vmul.f32 %v14, %v80
  %v83 = vmul.f32 %v15, %v80
  %v84 = vmul.f32 %v16, %v80
  %v85 = vmul.f32 %v17, %v80
  %v86 = vmul.f32 %v18, %v80
  %v87 = vmul.f32 %v19, %v80
  %v88 = vmul.f32 %v20, %v80
  %v89 = vmul.f32 %v21, %v80
  %v90 = vmul.f32 %v22, %v80
  %v91 = vmul.f32 %v23, %v80
  %v92 = vmul.f32 %v24, %v80
  %v93 = vmul.f32 %v25, %v80
  %v94 = vmul.f32 %v26, %v80
  %v95 = vmul.f32 %v27, %v80
  %v96 = vmul.f32 %v28, %v80
  %v97 = vmul.f32 %v29, %v80
  %v98 = vmul.f32 %v30, %v80
  %v99 = vmul.f32 %v31, %v80
  %v100 = vmul.f32 %v32, %v80
  %v101 = vmul.f32 %v33, %v80
  %v102 = vmul.f32 %v34, %v80
  %v103 = vmul.f32 %v35, %v80
  %v104 = vmul.f32 %v36, %v80
  %v105 = vmul.f32 %v37, %v80
  %v106 = vmul.f32 %v38, %v80
  %v107 = vmul.f32 %v39, %v80
  %v108 = vmul.f32 %v40, %v80
  %v109 = vmul.f32 %v41, %v80
  %v110 = vmul.f32 %v42, %v80
  %v111 = vmul.f32 %v43, %v80
  %v112 = vmul.f32 %v44, %v80
  %v113 = vmul.f32 %v45, %v80
  %v114 = vmul.f32 %v46, %v80
  %v115 = vmul.f32 %v47, %v80
  %v116 = vmul.f32 %v48, %v80
  %v117 = vmul.f32 %v49, %v80
  %v118 = vmul.f32 %v50, %v80
  %v119 = vmul.f32 %v51, %v80
  %v120 = vmul.f32 %v52, %v80
  %v121 = vmul.f32 %v53, %v80
  %v122 = vmul.f32 %v54, %v80
  %v123 = vmul.f32 %v55, %v80
  %v124 = vmul.f32 %v56, %v80
  %v125 = vmul.f32 %v57, %v80
  %v126 = vmul.f32 %v58, %v80
  %v127 = vmul.f32 %v59, %v80
  %v128 = vmul.f32 %v60, %v80
  %v129 = vmul.f32 %v61, %v80
  %v130 = vmul.f32 %v62, %v80
  %v131 = vmul.f32 %v63, %v80
  %v132 = vmul.f32 %v64, %v80
  %v133 = vmul.f32 %v65, %v80
  %v134 = vmul.f32 %v66, %v80
  %v135 = vmul.f32 %v67, %v80
  %v136 = vmul.f32 %v68, %v80
  %v137 = vmul.f32 %v69, %v80
  %v138 = vmul.f32 %v70, %v80
  %v139 = vmul.f32 %v71, %v80
  %v140 = vmul.f32 %v72, %v80
  %v141 = vmul.f32 %v73, %v80
  %v142 = vmul.f32 %v74, %v80
  %v143 = vmul.f32 %v75, %v80
  %v144 = vmul.f32 %v76, %v80
  %v145 = vmul.f32 %v77, %v80
  %v146 = vld [vmem:[%s2] sm:$0x1]
  %v148 = vperm.slane %v146, 0
  %v150 = vadd.f32 %v82, %v148
  %v151 = vadd.f32 %v83, %v148
  %v152 = vadd.f32 %v84, %v148
  %v153 = vadd.f32 %v85, %v148
  %v154 = vadd.f32 %v86, %v148
  %v155 = vadd.f32 %v87, %v148
  %v156 = vadd.f32 %v88, %v148
  %v157 = vadd.f32 %v89, %v148
  %v158 = vadd.f32 %v90, %v148
  %v159 = vadd.f32 %v91, %v148
  %v160 = vadd.f32 %v92, %v148
  %v161 = vadd.f32 %v93, %v148
  %v162 = vadd.f32 %v94, %v148
  %v163 = vadd.f32 %v95, %v148
  %v164 = vadd.f32 %v96, %v148
  %v165 = vadd.f32 %v97, %v148
  %v166 = vadd.f32 %v98, %v148
  %v167 = vadd.f32 %v99, %v148
  %v168 = vadd.f32 %v100, %v148
  %v169 = vadd.f32 %v101, %v148
  %v170 = vadd.f32 %v102, %v148
  %v171 = vadd.f32 %v103, %v148
  %v172 = vadd.f32 %v104, %v148
  %v173 = vadd.f32 %v105, %v148
  %v174 = vadd.f32 %v106, %v148
  %v175 = vadd.f32 %v107, %v148
  %v176 = vadd.f32 %v108, %v148
  %v177 = vadd.f32 %v109, %v148
  %v178 = vadd.f32 %v110, %v148
  %v179 = vadd.f32 %v111, %v148
  %v180 = vadd.f32 %v112, %v148
  %v181 = vadd.f32 %v113, %v148
  %v182 = vadd.f32 %v114, %v148
  %v183 = vadd.f32 %v115, %v148
  %v184 = vadd.f32 %v116, %v148
  %v185 = vadd.f32 %v117, %v148
  %v186 = vadd.f32 %v118, %v148
  %v187 = vadd.f32 %v119, %v148
  %v188 = vadd.f32 %v120, %v148
  %v189 = vadd.f32 %v121, %v148
  %v190 = vadd.f32 %v122, %v148
  %v191 = vadd.f32 %v123, %v148
  %v192 = vadd.f32 %v124, %v148
  %v193 = vadd.f32 %v125, %v148
  %v194 = vadd.f32 %v126, %v148
  %v195 = vadd.f32 %v127, %v148
  %v196 = vadd.f32 %v128, %v148
  %v197 = vadd.f32 %v129, %v148
  %v198 = vadd.f32 %v130, %v148
  %v199 = vadd.f32 %v131, %v148
  %v200 = vadd.f32 %v132, %v148
  %v201 = vadd.f32 %v133, %v148
  %v202 = vadd.f32 %v134, %v148
  %v203 = vadd.f32 %v135, %v148
  %v204 = vadd.f32 %v136, %v148
  %v205 = vadd.f32 %v137, %v148
  %v206 = vadd.f32 %v138, %v148
  %v207 = vadd.f32 %v139, %v148
  %v208 = vadd.f32 %v140, %v148
  %v209 = vadd.f32 %v141, %v148
  %v210 = vadd.f32 %v142, %v148
  %v211 = vadd.f32 %v143, %v148
  %v212 = vadd.f32 %v144, %v148
  %v213 = vadd.f32 %v145, %v148
  %214 = vst [vmem:[%s3] sm:$0xff] %v150
  %215 = vst [vmem:[%s3 + $0x8] sm:$0xff] %v151
  %216 = vst [vmem:[%s3 + $0x10] sm:$0xff] %v152
  %217 = vst [vmem:[%s3 + $0x18] sm:$0xff] %v153
  %218 = vst [vmem:[%s3 + $0x20] sm:$0xff] %v154
  %219 = vst [vmem:[%s3 + $0x28] sm:$0xff] %v155
  %220 = vst [vmem:[%s3 + $0x30] sm:$0xff] %v156
  %221 = vst [vmem:[%s3 + $0x38] sm:$0xff] %v157
  %222 = vst [vmem:[%s3 + $0x40] sm:$0xff] %v158
  %223 = vst [vmem:[%s3 + $0x48] sm:$0xff] %v159
  %224 = vst [vmem:[%s3 + $0x50] sm:$0xff] %v160
  %225 = vst [vmem:[%s3 + $0x58] sm:$0xff] %v161
  %226 = vst [vmem:[%s3 + $0x60] sm:$0xff] %v162
  %227 = vst [vmem:[%s3 + $0x68] sm:$0xff] %v163
  %228 = vst [vmem:[%s3 + $0x70] sm:$0xff] %v164
  %229 = vst [vmem:[%s3 + $0x78] sm:$0xff] %v165
  %230 = vst [vmem:[%s3 + $0x80] sm:$0xff] %v166
  %231 = vst [vmem:[%s3 + $0x88] sm:$0xff] %v167
  %232 = vst [vmem:[%s3 + $0x90] sm:$0xff] %v168
  %233 = vst [vmem:[%s3 + $0x98] sm:$0xff] %v169
  %234 = vst [vmem:[%s3 + $0xa0] sm:$0xff] %v170
  %235 = vst [vmem:[%s3 + $0xa8] sm:$0xff] %v171
  %236 = vst [vmem:[%s3 + $0xb0] sm:$0xff] %v172
  %237 = vst [vmem:[%s3 + $0xb8] sm:$0xff] %v173
  %238 = vst [vmem:[%s3 + $0xc0] sm:$0xff] %v174
  %239 = vst [vmem:[%s3 + $0xc8] sm:$0xff] %v175
  %240 = vst [vmem:[%s3 + $0xd0] sm:$0xff] %v176
  %241 = vst [vmem:[%s3 + $0xd8] sm:$0xff] %v177
  %242 = vst [vmem:[%s3 + $0xe0] sm:$0xff] %v178
  %243 = vst [vmem:[%s3 + $0xe8] sm:$0xff] %v179
  %244 = vst [vmem:[%s3 + $0xf0] sm:$0xff] %v180
  %245 = vst [vmem:[%s3 + $0xf8] sm:$0xff] %v181
  %246 = vst [vmem:[%s3 + $0x100] sm:$0xff] %v182
  %247 = vst [vmem:[%s3 + $0x108] sm:$0xff] %v183
  %248 = vst [vmem:[%s3 + $0x110] sm:$0xff] %v184
  %249 = vst [vmem:[%s3 + $0x118] sm:$0xff] %v185
  %250 = vst [vmem:[%s3 + $0x120] sm:$0xff] %v186
  %251 = vst [vmem:[%s3 + $0x128] sm:$0xff] %v187
  %252 = vst [vmem:[%s3 + $0x130] sm:$0xff] %v188
  %253 = vst [vmem:[%s3 + $0x138] sm:$0xff] %v189
  %254 = vst [vmem:[%s3 + $0x140] sm:$0xff] %v190
  %255 = vst [vmem:[%s3 + $0x148] sm:$0xff] %v191
  %256 = vst [vmem:[%s3 + $0x150] sm:$0xff] %v192
  %257 = vst [vmem:[%s3 + $0x158] sm:$0xff] %v193
  %258 = vst [vmem:[%s3 + $0x160] sm:$0xff] %v194
  %259 = vst [vmem:[%s3 + $0x168] sm:$0xff] %v195
  %260 = vst [vmem:[%s3 + $0x170] sm:$0xff] %v196
  %261 = vst [vmem:[%s3 + $0x178] sm:$0xff] %v197
  %262 = vst [vmem:[%s3 + $0x180] sm:$0xff] %v198
  %263 = vst [vmem:[%s3 + $0x188] sm:$0xff] %v199
  %264 = vst [vmem:[%s3 + $0x190] sm:$0xff] %v200
  %265 = vst [vmem:[%s3 + $0x198] sm:$0xff] %v201
  %266 = vst [vmem:[%s3 + $0x1a0] sm:$0xff] %v202
  %267 = vst [vmem:[%s3 + $0x1a8] sm:$0xff] %v203
  %268 = vst [vmem:[%s3 + $0x1b0] sm:$0xff] %v204
  %269 = vst [vmem:[%s3 + $0x1b8] sm:$0xff] %v205
  %270 = vst [vmem:[%s3 + $0x1c0] sm:$0xff] %v206
  %271 = vst [vmem:[%s3 + $0x1c8] sm:$0xff] %v207
  %272 = vst [vmem:[%s3 + $0x1d0] sm:$0xff] %v208
  %273 = vst [vmem:[%s3 + $0x1d8] sm:$0xff] %v209
  %274 = vst [vmem:[%s3 + $0x1e0] sm:$0xff] %v210
  %275 = vst [vmem:[%s3 + $0x1e8] sm:$0xff] %v211
  %276 = vst [vmem:[%s3 + $0x1f0] sm:$0xff] %v212
  %277 = vst [vmem:[%s3 + $0x1f8] sm:$0xff] %v213
  // Predicated region
  $region14: #{basic_conv2d.3} parent=0 // pred_check
    _
  $region15: #{basic_conv2d.3} parent=0 // pred_check_branch
    %279 = sbr.rel (0) target = $region17
  $region16: #{basic_conv2d.3} parent=0 // pred_region
    _
  $region17: #{basic_conv2d.3} parent=0 // pred_fallthru
    _
  // Predicated region
  $region18: #{basic_conv2d.3} parent=0 // pred_check
    _
  $region19: #{basic_conv2d.3} parent=0 // pred_check_branch
    %281 = sbr.rel (0) target = $region21
  $region20: #{basic_conv2d.3} parent=0 // pred_region
    _
  $region21: #{basic_conv2d.3} parent=0 // pred_fallthru
    _

// kernel: basic_conv2d.2
$region0: #{basic_conv2d.2}
  #allocation0 [shape = 'u32[]', space=smem, size = 0x4, offset = 0x4, fixed_abs, tag = 'smem constant byte address 0x4 - core index']
  #allocation1 [shape = 'u32[72,128]{1,0:T(1,128)}', space=vmem, size = 0x9000, scoped, tag = 'internal scratch']
  %s0 = inlined_call_operand.vmem [shape: bf16[512,128], index: 0, kind: input, shape index: {}]
  %s1 = inlined_call_operand.vmem [shape: bf16[128,128], index: 1, kind: input, shape index: {}]
  %s2 = inlined_call_operand.vmem [shape: f32[1,128], index: 2, kind: input, shape index: {}]
  %s3 = inlined_call_operand.vmem [shape: f32[512,128], index: 3, kind: output, shape index: {0}]
  %s4 = inlined_call_operand.vmem [shape: f32[8,128], index: 4, kind: output, shape index: {1}]
  %s5 = inlined_call_operand.vmem [shape: f32[8,128], index: 5, kind: output, shape index: {2}]
  %6 = xla_tuple %s3, %s4, %s5
  %s7 = sld [smem:[#allocation0]]
  $region38: #{basic_conv2d.2} parent=0
    _
  %s9 = ssub.s32 1, %s7
  %s10 = scalar_select 0, %s9, %s7
  // Predicated region
  $region2: #{basic_conv2d.2} parent=0 // pred_check
    _
  $region3: #{basic_conv2d.2} parent=0 // pred_check_branch
    %12 = sbr.rel (0) target = $region5
  $region4: #{basic_conv2d.2} parent=0 // pred_region
    _
  $region5: #{basic_conv2d.2} parent=0 // pred_fallthru
    _
  // Predicated region
  $region6: #{basic_conv2d.2} parent=0 // pred_check
    _
  $region7: #{basic_conv2d.2} parent=0 // pred_check_branch
    %14 = sbr.rel (0) target = $region9
  $region8: #{basic_conv2d.2} parent=0 // pred_region
    _
  $region9: #{basic_conv2d.2} parent=0 // pred_fallthru
    _
  // Predicated region
  $region10: #{basic_conv2d.2} parent=0 // pred_check
    _
  $region11: #{basic_conv2d.2} parent=0 // pred_check_branch
    %16 = sbr.rel (0) target = $region13
  $region12: #{basic_conv2d.2} parent=0 // pred_region
    _
  $region13: #{basic_conv2d.2} parent=0 // pred_fallthru
    _
  %v17 = vld [vmem:[%s0] sm:$0xf]
  %v18 = vld [vmem:[%s0 + $0x4] sm:$0xf]
  %v19 = vld [vmem:[%s0 + $0x8] sm:$0xf]
  %v20 = vld [vmem:[%s0 + $0xc] sm:$0xf]
  %v21 = vld [vmem:[%s0 + $0x10] sm:$0xf]
  %v22 = vld [vmem:[%s0 + $0x14] sm:$0xf]
  %v23 = vld [vmem:[%s0 + $0x18] sm:$0xf]
  %v24 = vld [vmem:[%s0 + $0x1c] sm:$0xf]
  %v25 = vld [vmem:[%s0 + $0x20] sm:$0xf]
  %v26 = vld [vmem:[%s0 + $0x24] sm:$0xf]
  %v27 = vld [vmem:[%s0 + $0x28] sm:$0xf]
  %v28 = vld [vmem:[%s0 + $0x2c] sm:$0xf]
  %v29 = vld [vmem:[%s0 + $0x30] sm:$0xf]
  %v30 = vld [vmem:[%s0 + $0x34] sm:$0xf]
  %v31 = vld [vmem:[%s0 + $0x38] sm:$0xf]
  %v32 = vld [vmem:[%s0 + $0x3c] sm:$0xf]
  %v33 = vld [vmem:[%s0 + $0x40] sm:$0xf]
  %v34 = vld [vmem:[%s0 + $0x44] sm:$0xf]
  %v35 = vld [vmem:[%s0 + $0x48] sm:$0xf]
  %v36 = vld [vmem:[%s0 + $0x4c] sm:$0xf]
  %v37 = vld [vmem:[%s0 + $0x50] sm:$0xf]
  %v38 = vld [vmem:[%s0 + $0x54] sm:$0xf]
  %v39 = vld [vmem:[%s0 + $0x58] sm:$0xf]
  %v40 = vld [vmem:[%s0 + $0x5c] sm:$0xf]
  %v41 = vld [vmem:[%s0 + $0x60] sm:$0xf]
  %v42 = vld [vmem:[%s0 + $0x64] sm:$0xf]
  %v43 = vld [vmem:[%s0 + $0x68] sm:$0xf]
  %v44 = vld [vmem:[%s0 + $0x6c] sm:$0xf]
  %v45 = vld [vmem:[%s0 + $0x70] sm:$0xf]
  %v46 = vld [vmem:[%s0 + $0x74] sm:$0xf]
  %v47 = vld [vmem:[%s0 + $0x78] sm:$0xf]
  %v48 = vld [vmem:[%s0 + $0x7c] sm:$0xf]
  %v49 = vld [vmem:[%s0 + $0x80] sm:$0xf]
  %v50 = vld [vmem:[%s0 + $0x84] sm:$0xf]
  %v51 = vld [vmem:[%s0 + $0x88] sm:$0xf]
  %v52 = vld [vmem:[%s0 + $0x8c] sm:$0xf]
  %v53 = vld [vmem:[%s0 + $0x90] sm:$0xf]
  %v54 = vld [vmem:[%s0 + $0x94] sm:$0xf]
  %v55 = vld [vmem:[%s0 + $0x98] sm:$0xf]
  %v56 = vld [vmem:[%s0 + $0x9c] sm:$0xf]
  %v57 = vld [vmem:[%s0 + $0xa0] sm:$0xf]
  %v58 = vld [vmem:[%s0 + $0xa4] sm:$0xf]
  %v59 = vld [vmem:[%s0 + $0xa8] sm:$0xf]
  %v60 = vld [vmem:[%s0 + $0xac] sm:$0xf]
  %v61 = vld [vmem:[%s0 + $0xb0] sm:$0xf]
  %v62 = vld [vmem:[%s0 + $0xb4] sm:$0xf]
  %v63 = vld [vmem:[%s0 + $0xb8] sm:$0xf]
  %v64 = vld [vmem:[%s0 + $0xbc] sm:$0xf]
  %v65 = vld [vmem:[%s0 + $0xc0] sm:$0xf]
  %v66 = vld [vmem:[%s0 + $0xc4] sm:$0xf]
  %v67 = vld [vmem:[%s0 + $0xc8] sm:$0xf]
  %v68 = vld [vmem:[%s0 + $0xcc] sm:$0xf]
  %v69 = vld [vmem:[%s0 + $0xd0] sm:$0xf]
  %v70 = vld [vmem:[%s0 + $0xd4] sm:$0xf]
  %v71 = vld [vmem:[%s0 + $0xd8] sm:$0xf]
  %v72 = vld [vmem:[%s0 + $0xdc] sm:$0xf]
  %v73 = vld [vmem:[%s0 + $0xe0] sm:$0xf]
  %v74 = vld [vmem:[%s0 + $0xe4] sm:$0xf]
  %v75 = vld [vmem:[%s0 + $0xe8] sm:$0xf]
  %v76 = vld [vmem:[%s0 + $0xec] sm:$0xf]
  %v77 = vld [vmem:[%s0 + $0xf0] sm:$0xf]
  %v78 = vld [vmem:[%s0 + $0xf4] sm:$0xf]
  %v79 = vld [vmem:[%s0 + $0xf8] sm:$0xf]
  %v80 = vld [vmem:[%s0 + $0xfc] sm:$0xf]
  %v81 = vld [vmem:[%s1] sm:$0xf]
  %v82 = vld [vmem:[%s1 + $0x4] sm:$0xf]
  %v83 = vld [vmem:[%s1 + $0x8] sm:$0xf]
  %v84 = vld [vmem:[%s1 + $0xc] sm:$0xf]
  %v85 = vld [vmem:[%s1 + $0x10] sm:$0xf]
  %v86 = vld [vmem:[%s1 + $0x14] sm:$0xf]
  %v87 = vld [vmem:[%s1 + $0x18] sm:$0xf]
  %v88 = vld [vmem:[%s1 + $0x1c] sm:$0xf]
  %v89 = vld [vmem:[%s1 + $0x20] sm:$0xf]
  %v90 = vld [vmem:[%s1 + $0x24] sm:$0xf]
  %v91 = vld [vmem:[%s1 + $0x28] sm:$0xf]
  %v92 = vld [vmem:[%s1 + $0x2c] sm:$0xf]
  %v93 = vld [vmem:[%s1 + $0x30] sm:$0xf]
  %v94 = vld [vmem:[%s1 + $0x34] sm:$0xf]
  %v95 = vld [vmem:[%s1 + $0x38] sm:$0xf]
  %v96 = vld [vmem:[%s1 + $0x3c] sm:$0xf]
  %v97 = vld [vmem:[%s2] sm:$0x1]
  %v99 = vperm.slane %v97, 0
  %v165 = vunpack.c.l.b16 %v17
  %v166 = vunpack.c.l.b16 %v18
  %v167 = vunpack.c.l.b16 %v19
  %v168 = vunpack.c.l.b16 %v20
  %v169 = vunpack.c.l.b16 %v21
  %v170 = vunpack.c.l.b16 %v22
  %v171 = vunpack.c.l.b16 %v23
  %v172 = vunpack.c.l.b16 %v24
  %v173 = vunpack.c.l.b16 %v25
  %v174 = vunpack.c.l.b16 %v26
  %v175 = vunpack.c.l.b16 %v27
  %v176 = vunpack.c.l.b16 %v28
  %v177 = vunpack.c.l.b16 %v29
  %v178 = vunpack.c.l.b16 %v30
  %v179 = vunpack.c.l.b16 %v31
  %v180 = vunpack.c.l.b16 %v32
  %v181 = vunpack.c.l.b16 %v33
  %v182 = vunpack.c.l.b16 %v34
  %v183 = vunpack.c.l.b16 %v35
  %v184 = vunpack.c.l.b16 %v36
  %v185 = vunpack.c.l.b16 %v37
  %v186 = vunpack.c.l.b16 %v38
  %v187 = vunpack.c.l.b16 %v39
  %v188 = vunpack.c.l.b16 %v40
  %v189 = vunpack.c.l.b16 %v41
  %v190 = vunpack.c.l.b16 %v42
  %v191 = vunpack.c.l.b16 %v43
  %v192 = vunpack.c.l.b16 %v44
  %v193 = vunpack.c.l.b16 %v45
  %v194 = vunpack.c.l.b16 %v46
  %v195 = vunpack.c.l.b16 %v47
  %v196 = vunpack.c.l.b16 %v48
  %v197 = vunpack.c.l.b16 %v49
  %v198 = vunpack.c.l.b16 %v50
  %v199 = vunpack.c.l.b16 %v51
  %v200 = vunpack.c.l.b16 %v52
  %v201 = vunpack.c.l.b16 %v53
  %v202 = vunpack.c.l.b16 %v54
  %v203 = vunpack.c.l.b16 %v55
  %v204 = vunpack.c.l.b16 %v56
  %v205 = vunpack.c.l.b16 %v57
  %v206 = vunpack.c.l.b16 %v58
  %v207 = vunpack.c.l.b16 %v59
  %v208 = vunpack.c.l.b16 %v60
  %v209 = vunpack.c.l.b16 %v61
  %v210 = vunpack.c.l.b16 %v62
  %v211 = vunpack.c.l.b16 %v63
  %v212 = vunpack.c.l.b16 %v64
  %v213 = vunpack.c.l.b16 %v65
  %v214 = vunpack.c.l.b16 %v66
  %v215 = vunpack.c.l.b16 %v67
  %v216 = vunpack.c.l.b16 %v68
  %v217 = vunpack.c.l.b16 %v69
  %v218 = vunpack.c.l.b16 %v70
  %v219 = vunpack.c.l.b16 %v71
  %v220 = vunpack.c.l.b16 %v72
  %v221 = vunpack.c.l.b16 %v73
  %v222 = vunpack.c.l.b16 %v74
  %v223 = vunpack.c.l.b16 %v75
  %v224 = vunpack.c.l.b16 %v76
  %v225 = vunpack.c.l.b16 %v77
  %v226 = vunpack.c.l.b16 %v78
  %v227 = vunpack.c.l.b16 %v79
  %v228 = vunpack.c.l.b16 %v80
  %v229 = vpack.c.b16 %v166, %v165
  %v230 = vpack.c.b16 %v168, %v167
  %v231 = vpack.c.b16 %v170, %v169
  %v232 = vpack.c.b16 %v172, %v171
  %v233 = vpack.c.b16 %v174, %v173
  %v234 = vpack.c.b16 %v176, %v175
  %v235 = vpack.c.b16 %v178, %v177
  %v236 = vpack.c.b16 %v180, %v179
  %v237 = vpack.c.b16 %v182, %v181
  %v238 = vpack.c.b16 %v184, %v183
  %v239 = vpack.c.b16 %v186, %v185
  %v240 = vpack.c.b16 %v188, %v187
  %v241 = vpack.c.b16 %v190, %v189
  %v242 = vpack.c.b16 %v192, %v191
  %v243 = vpack.c.b16 %v194, %v193
  %v244 = vpack.c.b16 %v196, %v195
  %v245 = vpack.c.b16 %v198, %v197
  %v246 = vpack.c.b16 %v200, %v199
  %v247 = vpack.c.b16 %v202, %v201
  %v248 = vpack.c.b16 %v204, %v203
  %v249 = vpack.c.b16 %v206, %v205
  %v250 = vpack.c.b16 %v208, %v207
  %v251 = vpack.c.b16 %v210, %v209
  %v252 = vpack.c.b16 %v212, %v211
  %v253 = vpack.c.b16 %v214, %v213
  %v254 = vpack.c.b16 %v216, %v215
  %v255 = vpack.c.b16 %v218, %v217
  %v256 = vpack.c.b16 %v220, %v219
  %v257 = vpack.c.b16 %v222, %v221
  %v258 = vpack.c.b16 %v224, %v223
  %v259 = vpack.c.b16 %v226, %v225
  %v260 = vpack.c.b16 %v228, %v227
  %v309 = vunpack.c.l.b16 %v81
  %v310 = vunpack.c.l.b16 %v82
  %v311 = vunpack.c.l.b16 %v83
  %v312 = vunpack.c.l.b16 %v84
  %v313 = vunpack.c.l.b16 %v85
  %v314 = vunpack.c.l.b16 %v86
  %v315 = vunpack.c.l.b16 %v87
  %v316 = vunpack.c.l.b16 %v88
  %v317 = vunpack.c.l.b16 %v89
  %v318 = vunpack.c.l.b16 %v90
  %v319 = vunpack.c.l.b16 %v91
  %v320 = vunpack.c.l.b16 %v92
  %v321 = vunpack.c.l.b16 %v93
  %v322 = vunpack.c.l.b16 %v94
  %v323 = vunpack.c.l.b16 %v95
  %v324 = vunpack.c.l.b16 %v96
  %v325 = vpack.c.b16 %v310, %v309
  %v326 = vpack.c.b16 %v312, %v311
  %v327 = vpack.c.b16 %v314, %v313
  %v328 = vpack.c.b16 %v316, %v315
  %v329 = vpack.c.b16 %v318, %v317
  %v330 = vpack.c.b16 %v320, %v319
  %v331 = vpack.c.b16 %v322, %v321
  %v332 = vpack.c.b16 %v324, %v323
  %341 = vmatpush.bf16.msra.mxu0 %v332
  %342 = vmatpush.bf16.msra.mxu0 %v331
  %343 = vmatpush.bf16.msra.mxu0 %v330
  %344 = vmatpush.bf16.msra.mxu0 %v329
  %345 = vmatpush.bf16.msra.mxu0 %v328
  %346 = vmatpush.bf16.msra.mxu0 %v327
  %347 = vmatpush.bf16.msra.mxu0 %v326
  %348 = vmatpush.bf16.msra.mxu0 %v325
  %349 = vmatmul.bf16.gmra.mxu0 %v229
  %v350 = vpop.f32.mrf.mxu0
  %v351 = vadd.f32 %v99, %v350
  %v352 = vpop.f32.mrf.mxu0
  %v353 = vadd.f32 %v99, %v352
  %354 = vmatmul.bf16.gmra.mxu0 %v230
  %v355 = vpop.f32.mrf.mxu0
  %v356 = vadd.f32 %v99, %v355
  %v357 = vpop.f32.mrf.mxu0
  %v358 = vadd.f32 %v99, %v357
  %359 = vmatmul.bf16.gmra.mxu0 %v231
  %v360 = vpop.f32.mrf.mxu0
  %v361 = vadd.f32 %v99, %v360
  %v362 = vpop.f32.mrf.mxu0
  %v363 = vadd.f32 %v99, %v362
  %364 = vmatmul.bf16.gmra.mxu0 %v232
  %v365 = vpop.f32.mrf.mxu0
  %v366 = vadd.f32 %v99, %v365
  %v367 = vpop.f32.mrf.mxu0
  %v368 = vadd.f32 %v99, %v367
  %369 = vmatmul.bf16.gmra.mxu0 %v233
  %v370 = vpop.f32.mrf.mxu0
  %v371 = vadd.f32 %v99, %v370
  %v372 = vpop.f32.mrf.mxu0
  %v373 = vadd.f32 %v99, %v372
  %374 = vmatmul.bf16.gmra.mxu0 %v234
  %v375 = vpop.f32.mrf.mxu0
  %v376 = vadd.f32 %v99, %v375
  %v377 = vpop.f32.mrf.mxu0
  %v378 = vadd.f32 %v99, %v377
  %379 = vmatmul.bf16.gmra.mxu0 %v235
  %v380 = vpop.f32.mrf.mxu0
  %v381 = vadd.f32 %v99, %v380
  %v382 = vpop.f32.mrf.mxu0
  %v383 = vadd.f32 %v99, %v382
  %384 = vmatmul.bf16.gmra.mxu0 %v236
  %v385 = vpop.f32.mrf.mxu0
  %v386 = vadd.f32 %v99, %v385
  %v387 = vpop.f32.mrf.mxu0
  %v388 = vadd.f32 %v99, %v387
  %389 = vmatmul.bf16.gmra.mxu0 %v237
  %v390 = vpop.f32.mrf.mxu0
  %v391 = vadd.f32 %v99, %v390
  %v392 = vpop.f32.mrf.mxu0
  %v393 = vadd.f32 %v99, %v392
  %394 = vmatmul.bf16.gmra.mxu0 %v238
  %v395 = vpop.f32.mrf.mxu0
  %v396 = vadd.f32 %v99, %v395
  %v397 = vpop.f32.mrf.mxu0
  %v398 = vadd.f32 %v99, %v397
  %399 = vmatmul.bf16.gmra.mxu0 %v239
  %v400 = vpop.f32.mrf.mxu0
  %v401 = vadd.f32 %v99, %v400
  %v402 = vpop.f32.mrf.mxu0
  %v403 = vadd.f32 %v99, %v402
  %404 = vmatmul.bf16.gmra.mxu0 %v240
  %v405 = vpop.f32.mrf.mxu0
  %v406 = vadd.f32 %v99, %v405
  %v407 = vpop.f32.mrf.mxu0
  %v408 = vadd.f32 %v99, %v407
  %409 = vmatmul.bf16.gmra.mxu0 %v241
  %v410 = vpop.f32.mrf.mxu0
  %v411 = vadd.f32 %v99, %v410
  %v412 = vpop.f32.mrf.mxu0
  %v413 = vadd.f32 %v99, %v412
  %414 = vmatmul.bf16.gmra.mxu0 %v242
  %v415 = vpop.f32.mrf.mxu0
  %v416 = vadd.f32 %v99, %v415
  %v417 = vpop.f32.mrf.mxu0
  %v418 = vadd.f32 %v99, %v417
  %419 = vmatmul.bf16.gmra.mxu0 %v243
  %v420 = vpop.f32.mrf.mxu0
  %v421 = vadd.f32 %v99, %v420
  %v422 = vpop.f32.mrf.mxu0
  %v423 = vadd.f32 %v99, %v422
  %424 = vmatmul.bf16.gmra.mxu0 %v244
  %v425 = vpop.f32.mrf.mxu0
  %v426 = vadd.f32 %v99, %v425
  %v427 = vpop.f32.mrf.mxu0
  %v428 = vadd.f32 %v99, %v427
  %429 = vmatmul.bf16.gmra.mxu0 %v245
  %v430 = vpop.f32.mrf.mxu0
  %v431 = vadd.f32 %v99, %v430
  %v432 = vpop.f32.mrf.mxu0
  %v433 = vadd.f32 %v99, %v432
  %434 = vmatmul.bf16.gmra.mxu0 %v246
  %v435 = vpop.f32.mrf.mxu0
  %v436 = vadd.f32 %v99, %v435
  %v437 = vpop.f32.mrf.mxu0
  %v438 = vadd.f32 %v99, %v437
  %439 = vmatmul.bf16.gmra.mxu0 %v247
  %v440 = vpop.f32.mrf.mxu0
  %v441 = vadd.f32 %v99, %v440
  %v442 = vpop.f32.mrf.mxu0
  %v443 = vadd.f32 %v99, %v442
  %444 = vmatmul.bf16.gmra.mxu0 %v248
  %v445 = vpop.f32.mrf.mxu0
  %v446 = vadd.f32 %v99, %v445
  %v447 = vpop.f32.mrf.mxu0
  %v448 = vadd.f32 %v99, %v447
  %449 = vmatmul.bf16.gmra.mxu0 %v249
  %v450 = vpop.f32.mrf.mxu0
  %v451 = vadd.f32 %v99, %v450
  %v452 = vpop.f32.mrf.mxu0
  %v453 = vadd.f32 %v99, %v452
  %454 = vmatmul.bf16.gmra.mxu0 %v250
  %v455 = vpop.f32.mrf.mxu0
  %v456 = vadd.f32 %v99, %v455
  %v457 = vpop.f32.mrf.mxu0
  %v458 = vadd.f32 %v99, %v457
  %459 = vmatmul.bf16.gmra.mxu0 %v251
  %v460 = vpop.f32.mrf.mxu0
  %v461 = vadd.f32 %v99, %v460
  %v462 = vpop.f32.mrf.mxu0
  %v463 = vadd.f32 %v99, %v462
  %464 = vmatmul.bf16.gmra.mxu0 %v252
  %v465 = vpop.f32.mrf.mxu0
  %v466 = vadd.f32 %v99, %v465
  %v467 = vpop.f32.mrf.mxu0
  %v468 = vadd.f32 %v99, %v467
  %469 = vmatmul.bf16.gmra.mxu0 %v253
  %v470 = vpop.f32.mrf.mxu0
  %v471 = vadd.f32 %v99, %v470
  %v472 = vpop.f32.mrf.mxu0
  %v473 = vadd.f32 %v99, %v472
  %474 = vmatmul.bf16.gmra.mxu0 %v254
  %v475 = vpop.f32.mrf.mxu0
  %v476 = vadd.f32 %v99, %v475
  %v477 = vpop.f32.mrf.mxu0
  %v478 = vadd.f32 %v99, %v477
  %479 = vmatmul.bf16.gmra.mxu0 %v255
  %v480 = vpop.f32.mrf.mxu0
  %v481 = vadd.f32 %v99, %v480
  %v482 = vpop.f32.mrf.mxu0
  %v483 = vadd.f32 %v99, %v482
  %484 = vmatmul.bf16.gmra.mxu0 %v256
  %v485 = vpop.f32.mrf.mxu0
  %v486 = vadd.f32 %v99, %v485
  %v487 = vpop.f32.mrf.mxu0
  %v488 = vadd.f32 %v99, %v487
  %489 = vmatmul.bf16.gmra.mxu0 %v257
  %v490 = vpop.f32.mrf.mxu0
  %v491 = vadd.f32 %v99, %v490
  %v492 = vpop.f32.mrf.mxu0
  %v493 = vadd.f32 %v99, %v492
  %494 = vmatmul.bf16.gmra.mxu0 %v258
  %v495 = vpop.f32.mrf.mxu0
  %v496 = vadd.f32 %v99, %v495
  %v497 = vpop.f32.mrf.mxu0
  %v498 = vadd.f32 %v99, %v497
  %499 = vmatmul.bf16.gmra.mxu0 %v259
  %v500 = vpop.f32.mrf.mxu0
  %v501 = vadd.f32 %v99, %v500
  %v502 = vpop.f32.mrf.mxu0
  %v503 = vadd.f32 %v99, %v502
  %504 = vmatmul.bf16.gmra.mxu0 %v260
  %v505 = vpop.f32.mrf.mxu0
  %v506 = vadd.f32 %v99, %v505
  %v507 = vpop.f32.mrf.mxu0
  %v508 = vadd.f32 %v99, %v507
  %509 = vdwg.mxu0
  %510 = vst [vmem:[%s3] sm:$0xff] %v351
  %511 = vst [vmem:[%s3 + $0x8] sm:$0xff] %v353
  %512 = vst [vmem:[%s3 + $0x10] sm:$0xff] %v356
  %513 = vst [vmem:[%s3 + $0x18] sm:$0xff] %v358
  %514 = vst [vmem:[%s3 + $0x20] sm:$0xff] %v361
  %515 = vst [vmem:[%s3 + $0x28] sm:$0xff] %v363
  %516 = vst [vmem:[%s3 + $0x30] sm:$0xff] %v366
  %517 = vst [vmem:[%s3 + $0x38] sm:$0xff] %v368
  %518 = vst [vmem:[%s3 + $0x40] sm:$0xff] %v371
  %519 = vst [vmem:[%s3 + $0x48] sm:$0xff] %v373
  %520 = vst [vmem:[%s3 + $0x50] sm:$0xff] %v376
  %521 = vst [vmem:[%s3 + $0x58] sm:$0xff] %v378
  %522 = vst [vmem:[%s3 + $0x60] sm:$0xff] %v381
  %523 = vst [vmem:[%s3 + $0x68] sm:$0xff] %v383
  %524 = vst [vmem:[%s3 + $0x70] sm:$0xff] %v386
  %525 = vst [vmem:[%s3 + $0x78] sm:$0xff] %v388
  %526 = vst [vmem:[%s3 + $0x80] sm:$0xff] %v391
  %527 = vst [vmem:[%s3 + $0x88] sm:$0xff] %v393
  %528 = vst [vmem:[%s3 + $0x90] sm:$0xff] %v396
  %529 = vst [vmem:[%s3 + $0x98] sm:$0xff] %v398
  %530 = vst [vmem:[%s3 + $0xa0] sm:$0xff] %v401
  %531 = vst [vmem:[%s3 + $0xa8] sm:$0xff] %v403
  %532 = vst [vmem:[%s3 + $0xb0] sm:$0xff] %v406
  %533 = vst [vmem:[%s3 + $0xb8] sm:$0xff] %v408
  %534 = vst [vmem:[%s3 + $0xc0] sm:$0xff] %v411
  %535 = vst [vmem:[%s3 + $0xc8] sm:$0xff] %v413
  %536 = vst [vmem:[%s3 + $0xd0] sm:$0xff] %v416
  %537 = vst [vmem:[%s3 + $0xd8] sm:$0xff] %v418
  %538 = vst [vmem:[%s3 + $0xe0] sm:$0xff] %v421
  %539 = vst [vmem:[%s3 + $0xe8] sm:$0xff] %v423
  %540 = vst [vmem:[%s3 + $0xf0] sm:$0xff] %v426
  %541 = vst [vmem:[%s3 + $0xf8] sm:$0xff] %v428
  %542 = vst [vmem:[%s3 + $0x100] sm:$0xff] %v431
  %543 = vst [vmem:[%s3 + $0x108] sm:$0xff] %v433
  %544 = vst [vmem:[%s3 + $0x110] sm:$0xff] %v436
  %545 = vst [vmem:[%s3 + $0x118] sm:$0xff] %v438
  %546 = vst [vmem:[%s3 + $0x120] sm:$0xff] %v441
  %547 = vst [vmem:[%s3 + $0x128] sm:$0xff] %v443
  %548 = vst [vmem:[%s3 + $0x130] sm:$0xff] %v446
  %549 = vst [vmem:[%s3 + $0x138] sm:$0xff] %v448
  %550 = vst [vmem:[%s3 + $0x140] sm:$0xff] %v451
  %551 = vst [vmem:[%s3 + $0x148] sm:$0xff] %v453
  %552 = vst [vmem:[%s3 + $0x150] sm:$0xff] %v456
  %553 = vst [vmem:[%s3 + $0x158] sm:$0xff] %v458
  %554 = vst [vmem:[%s3 + $0x160] sm:$0xff] %v461
  %555 = vst [vmem:[%s3 + $0x168] sm:$0xff] %v463
  %556 = vst [vmem:[%s3 + $0x170] sm:$0xff] %v466
  %557 = vst [vmem:[%s3 + $0x178] sm:$0xff] %v468
  %558 = vst [vmem:[%s3 + $0x180] sm:$0xff] %v471
  %559 = vst [vmem:[%s3 + $0x188] sm:$0xff] %v473
  %560 = vst [vmem:[%s3 + $0x190] sm:$0xff] %v476
  %561 = vst [vmem:[%s3 + $0x198] sm:$0xff] %v478
  %562 = vst [vmem:[%s3 + $0x1a0] sm:$0xff] %v481
  %563 = vst [vmem:[%s3 + $0x1a8] sm:$0xff] %v483
  %564 = vst [vmem:[%s3 + $0x1b0] sm:$0xff] %v486
  %565 = vst [vmem:[%s3 + $0x1b8] sm:$0xff] %v488
  %566 = vst [vmem:[%s3 + $0x1c0] sm:$0xff] %v491
  %567 = vst [vmem:[%s3 + $0x1c8] sm:$0xff] %v493
  %568 = vst [vmem:[%s3 + $0x1d0] sm:$0xff] %v496
  %569 = vst [vmem:[%s3 + $0x1d8] sm:$0xff] %v498
  %570 = vst [vmem:[%s3 + $0x1e0] sm:$0xff] %v501
  %571 = vst [vmem:[%s3 + $0x1e8] sm:$0xff] %v503
  %572 = vst [vmem:[%s3 + $0x1f0] sm:$0xff] %v506
  %573 = vst [vmem:[%s3 + $0x1f8] sm:$0xff] %v508
  %v574 = vlaneseq
  %v575 = vshrl.u32 %v574, 7
  %v576 = vadd.s32 %v575, 8
  %v577 = vadd.s32 %v575, 16
  %v578 = vadd.s32 %v575, 24
  %v579 = vadd.s32 %v575, 32
  %v580 = vadd.s32 %v575, 40
  %v581 = vadd.s32 %v575, 48
  %v582 = vadd.s32 %v575, 56
  %v583 = vadd.s32 %v575, 64
  %v584 = vadd.s32 %v575, 72
  %v585 = vadd.s32 %v575, 80
  %v586 = vadd.s32 %v575, 88
  %v587 = vadd.s32 %v575, 96
  %v588 = vadd.s32 %v575, 104
  %v589 = vadd.s32 %v575, 112
  %v590 = vadd.s32 %v575, 120
  %v591 = vadd.s32 %v575, 128
  %v592 = vadd.s32 %v575, 136
  %v593 = vadd.s32 %v575, 144
  %v594 = vadd.s32 %v575, 152
  %v595 = vadd.s32 %v575, 160
  %v596 = vadd.s32 %v575, 168
  %v597 = vadd.s32 %v575, 176
  %v598 = vadd.s32 %v575, 184
  %v599 = vadd.s32 %v575, 192
  %v600 = vadd.s32 %v575, 200
  %v601 = vadd.s32 %v575, 208
  %v602 = vadd.s32 %v575, 216
  %v603 = vadd.s32 %v575, 224
  %v604 = vadd.s32 %v575, 232
  %v605 = vadd.s32 %v575, 240
  %v606 = vadd.s32 %v575, 248
  %v607 = vadd.s32 %v575, 256
  %v608 = vadd.s32 %v575, 264
  %v609 = vadd.s32 %v575, 272
  %v610 = vadd.s32 %v575, 280
  %v611 = vadd.s32 %v575, 288
  %v612 = vadd.s32 %v575, 296
  %v613 = vadd.s32 %v575, 304
  %v614 = vadd.s32 %v575, 312
  %v615 = vadd.s32 %v575, 320
  %v616 = vadd.s32 %v575, 328
  %v617 = vadd.s32 %v575, 336
  %v618 = vadd.s32 %v575, 344
  %v619 = vadd.s32 %v575, 352
  %v620 = vadd.s32 %v575, 360
  %v621 = vadd.s32 %v575, 368
  %v622 = vadd.s32 %v575, 376
  %v623 = vadd.s32 %v575, 384
  %v624 = vadd.s32 %v575, 392
  %v625 = vadd.s32 %v575, 400
  %v626 = vadd.s32 %v575, 408
  %v627 = vadd.s32 %v575, 416
  %v628 = vadd.s32 %v575, 424
  %v629 = vadd.s32 %v575, 432
  %v630 = vadd.s32 %v575, 440
  %v631 = vadd.s32 %v575, 448
  %v632 = vadd.s32 %v575, 456
  %v633 = vadd.s32 %v575, 464
  %v634 = vadd.s32 %v575, 472
  %v635 = vadd.s32 %v575, 480
  %v636 = vadd.s32 %v575, 488
  %v637 = vadd.s32 %v575, 496
  %v638 = vadd.s32 %v575, 504
  %s639 = smul.u32 0, 512
  %v640 = vstv %s639
  %v641 = vadd.s32 %v575, %v640
  %v642 = vadd.s32 %v576, %v640
  %v643 = vadd.s32 %v577, %v640
  %v644 = vadd.s32 %v578, %v640
  %v645 = vadd.s32 %v579, %v640
  %v646 = vadd.s32 %v580, %v640
  %v647 = vadd.s32 %v581, %v640
  %v648 = vadd.s32 %v582, %v640
  %v649 = vadd.s32 %v583, %v640
  %v650 = vadd.s32 %v584, %v640
  %v651 = vadd.s32 %v585, %v640
  %v652 = vadd.s32 %v586, %v640
  %v653 = vadd.s32 %v587, %v640
  %v654 = vadd.s32 %v588, %v640
  %v655 = vadd.s32 %v589, %v640
  %v656 = vadd.s32 %v590, %v640
  %v657 = vadd.s32 %v591, %v640
  %v658 = vadd.s32 %v592, %v640
  %v659 = vadd.s32 %v593, %v640
  %v660 = vadd.s32 %v594, %v640
  %v661 = vadd.s32 %v595, %v640
  %v662 = vadd.s32 %v596, %v640
  %v663 = vadd.s32 %v597, %v640
  %v664 = vadd.s32 %v598, %v640
  %v665 = vadd.s32 %v599, %v640
  %v666 = vadd.s32 %v600, %v640
  %v667 = vadd.s32 %v601, %v640
  %v668 = vadd.s32 %v602, %v640
  %v669 = vadd.s32 %v603, %v640
  %v670 = vadd.s32 %v604, %v640
  %v671 = vadd.s32 %v605, %v640
  %v672 = vadd.s32 %v606, %v640
  %v673 = vadd.s32 %v607, %v640
  %v674 = vadd.s32 %v608, %v640
  %v675 = vadd.s32 %v609, %v640
  %v676 = vadd.s32 %v610, %v640
  %v677 = vadd.s32 %v611, %v640
  %v678 = vadd.s32 %v612, %v640
  %v679 = vadd.s32 %v613, %v640
  %v680 = vadd.s32 %v614, %v640
  %v681 = vadd.s32 %v615, %v640
  %v682 = vadd.s32 %v616, %v640
  %v683 = vadd.s32 %v617, %v640
  %v684 = vadd.s32 %v618, %v640
  %v685 = vadd.s32 %v619, %v640
  %v686 = vadd.s32 %v620, %v640
  %v687 = vadd.s32 %v621, %v640
  %v688 = vadd.s32 %v622, %v640
  %v689 = vadd.s32 %v623, %v640
  %v690 = vadd.s32 %v624, %v640
  %v691 = vadd.s32 %v625, %v640
  %v692 = vadd.s32 %v626, %v640
  %v693 = vadd.s32 %v627, %v640
  %v694 = vadd.s32 %v628, %v640
  %v695 = vadd.s32 %v629, %v640
  %v696 = vadd.s32 %v630, %v640
  %v697 = vadd.s32 %v631, %v640
  %v698 = vadd.s32 %v632, %v640
  %v699 = vadd.s32 %v633, %v640
  %v700 = vadd.s32 %v634, %v640
  %v701 = vadd.s32 %v635, %v640
  %v702 = vadd.s32 %v636, %v640
  %v703 = vadd.s32 %v637, %v640
  %v704 = vadd.s32 %v638, %v640
  %vm705 = vcmp.lt.s32.totalorder %v641, 512
  %vm706 = vcmp.lt.s32.totalorder %v642, 512
  %vm707 = vcmp.lt.s32.totalorder %v643, 512
  %vm708 = vcmp.lt.s32.totalorder %v644, 512
  %vm709 = vcmp.lt.s32.totalorder %v645, 512
  %vm710 = vcmp.lt.s32.totalorder %v646, 512
  %vm711 = vcmp.lt.s32.totalorder %v647, 512
  %vm712 = vcmp.lt.s32.totalorder %v648, 512
  %vm713 = vcmp.lt.s32.totalorder %v649, 512
  %vm714 = vcmp.lt.s32.totalorder %v650, 512
  %vm715 = vcmp.lt.s32.totalorder %v651, 512
  %vm716 = vcmp.lt.s32.totalorder %v652, 512
  %vm717 = vcmp.lt.s32.totalorder %v653, 512
  %vm718 = vcmp.lt.s32.totalorder %v654, 512
  %vm719 = vcmp.lt.s32.totalorder %v655, 512
  %vm720 = vcmp.lt.s32.totalorder %v656, 512
  %vm721 = vcmp.lt.s32.totalorder %v657, 512
  %vm722 = vcmp.lt.s32.totalorder %v658, 512
  %vm723 = vcmp.lt.s32.totalorder %v659, 512
  %vm724 = vcmp.lt.s32.totalorder %v660, 512
  %vm725 = vcmp.lt.s32.totalorder %v661, 512
  %vm726 = vcmp.lt.s32.totalorder %v662, 512
  %vm727 = vcmp.lt.s32.totalorder %v663, 512
  %vm728 = vcmp.lt.s32.totalorder %v664, 512
  %vm729 = vcmp.lt.s32.totalorder %v665, 512
  %vm730 = vcmp.lt.s32.totalorder %v666, 512
  %vm731 = vcmp.lt.s32.totalorder %v667, 512
  %vm732 = vcmp.lt.s32.totalorder %v668, 512
  %vm733 = vcmp.lt.s32.totalorder %v669, 512
  %vm734 = vcmp.lt.s32.totalorder %v670, 512
  %vm735 = vcmp.lt.s32.totalorder %v671, 512
  %vm736 = vcmp.lt.s32.totalorder %v672, 512
  %vm737 = vcmp.lt.s32.totalorder %v673, 512
  %vm738 = vcmp.lt.s32.totalorder %v674, 512
  %vm739 = vcmp.lt.s32.totalorder %v675, 512
  %vm740 = vcmp.lt.s32.totalorder %v676, 512
  %vm741 = vcmp.lt.s32.totalorder %v677, 512
  %vm742 = vcmp.lt.s32.totalorder %v678, 512
  %vm743 = vcmp.lt.s32.totalorder %v679, 512
  %vm744 = vcmp.lt.s32.totalorder %v680, 512
  %vm745 = vcmp.lt.s32.totalorder %v681, 512
  %vm746 = vcmp.lt.s32.totalorder %v682, 512
  %vm747 = vcmp.lt.s32.totalorder %v683, 512
  %vm748 = vcmp.lt.s32.totalorder %v684, 512
  %vm749 = vcmp.lt.s32.totalorder %v685, 512
  %vm750 = vcmp.lt.s32.totalorder %v686, 512
  %vm751 = vcmp.lt.s32.totalorder %v687, 512
  %vm752 = vcmp.lt.s32.totalorder %v688, 512
  %vm753 = vcmp.lt.s32.totalorder %v689, 512
  %vm754 = vcmp.lt.s32.totalorder %v690, 512
  %vm755 = vcmp.lt.s32.totalorder %v691, 512
  %vm756 = vcmp.lt.s32.totalorder %v692, 512
  %vm757 = vcmp.lt.s32.totalorder %v693, 512
  %vm758 = vcmp.lt.s32.totalorder %v694, 512
  %vm759 = vcmp.lt.s32.totalorder %v695, 512
  %vm760 = vcmp.lt.s32.totalorder %v696, 512
  %vm761 = vcmp.lt.s32.totalorder %v697, 512
  %vm762 = vcmp.lt.s32.totalorder %v698, 512
  %vm763 = vcmp.lt.s32.totalorder %v699, 512
  %vm764 = vcmp.lt.s32.totalorder %v700, 512
  %vm765 = vcmp.lt.s32.totalorder %v701, 512
  %vm766 = vcmp.lt.s32.totalorder %v702, 512
  %vm767 = vcmp.lt.s32.totalorder %v703, 512
  %vm768 = vcmp.lt.s32.totalorder %v704, 512
  %v769 = vsel %vm705, 1, 0
  %v770 = vsel %vm706, 1, 0
  %v771 = vsel %vm707, 1, 0
  %v772 = vsel %vm708, 1, 0
  %v773 = vsel %vm709, 1, 0
  %v774 = vsel %vm710, 1, 0
  %v775 = vsel %vm711, 1, 0
  %v776 = vsel %vm712, 1, 0
  %v777 = vsel %vm713, 1, 0
  %v778 = vsel %vm714, 1, 0
  %v779 = vsel %vm715, 1, 0
  %v780 = vsel %vm716, 1, 0
  %v781 = vsel %vm717, 1, 0
  %v782 = vsel %vm718, 1, 0
  %v783 = vsel %vm719, 1, 0
  %v784 = vsel %vm720, 1, 0
  %v785 = vsel %vm721, 1, 0
  %v786 = vsel %vm722, 1, 0
  %v787 = vsel %vm723, 1, 0
  %v788 = vsel %vm724, 1, 0
  %v789 = vsel %vm725, 1, 0
  %v790 = vsel %vm726, 1, 0
  %v791 = vsel %vm727, 1, 0
  %v792 = vsel %vm728, 1, 0
  %v793 = vsel %vm729, 1, 0
  %v794 = vsel %vm730, 1, 0
  %v795 = vsel %vm731, 1, 0
  %v796 = vsel %vm732, 1, 0
  %v797 = vsel %vm733, 1, 0
  %v798 = vsel %vm734, 1, 0
  %v799 = vsel %vm735, 1, 0
  %v800 = vsel %vm736, 1, 0
  %v801 = vsel %vm737, 1, 0
  %v802 = vsel %vm738, 1, 0
  %v803 = vsel %vm739, 1, 0
  %v804 = vsel %vm740, 1, 0
  %v805 = vsel %vm741, 1, 0
  %v806 = vsel %vm742, 1, 0
  %v807 = vsel %vm743, 1, 0
  %v808 = vsel %vm744, 1, 0
  %v809 = vsel %vm745, 1, 0
  %v810 = vsel %vm746, 1, 0
  %v811 = vsel %vm747, 1, 0
  %v812 = vsel %vm748, 1, 0
  %v813 = vsel %vm749, 1, 0
  %v814 = vsel %vm750, 1, 0
  %v815 = vsel %vm751, 1, 0
  %v816 = vsel %vm752, 1, 0
  %v817 = vsel %vm753, 1, 0
  %v818 = vsel %vm754, 1, 0
  %v819 = vsel %vm755, 1, 0
  %v820 = vsel %vm756, 1, 0
  %v821 = vsel %vm757, 1, 0
  %v822 = vsel %vm758, 1, 0
  %v823 = vsel %vm759, 1, 0
  %v824 = vsel %vm760, 1, 0
  %v825 = vsel %vm761, 1, 0
  %v826 = vsel %vm762, 1, 0
  %v827 = vsel %vm763, 1, 0
  %v828 = vsel %vm764, 1, 0
  %v829 = vsel %vm765, 1, 0
  %v830 = vsel %vm766, 1, 0
  %v831 = vsel %vm767, 1, 0
  %v832 = vsel %vm768, 1, 0
  %v833 = vcvt.s32.f32 %v769
  %v834 = vcvt.s32.f32 %v770
  %v835 = vcvt.s32.f32 %v771
  %v836 = vcvt.s32.f32 %v772
  %v837 = vcvt.s32.f32 %v773
  %v838 = vcvt.s32.f32 %v774
  %v839 = vcvt.s32.f32 %v775
  %v840 = vcvt.s32.f32 %v776
  %v841 = vcvt.s32.f32 %v777
  %v842 = vcvt.s32.f32 %v778
  %v843 = vcvt.s32.f32 %v779
  %v844 = vcvt.s32.f32 %v780
  %v845 = vcvt.s32.f32 %v781
  %v846 = vcvt.s32.f32 %v782
  %v847 = vcvt.s32.f32 %v783
  %v848 = vcvt.s32.f32 %v784
  %v849 = vcvt.s32.f32 %v785
  %v850 = vcvt.s32.f32 %v786
  %v851 = vcvt.s32.f32 %v787
  %v852 = vcvt.s32.f32 %v788
  %v853 = vcvt.s32.f32 %v789
  %v854 = vcvt.s32.f32 %v790
  %v855 = vcvt.s32.f32 %v791
  %v856 = vcvt.s32.f32 %v792
  %v857 = vcvt.s32.f32 %v793
  %v858 = vcvt.s32.f32 %v794
  %v859 = vcvt.s32.f32 %v795
  %v860 = vcvt.s32.f32 %v796
  %v861 = vcvt.s32.f32 %v797
  %v862 = vcvt.s32.f32 %v798
  %v863 = vcvt.s32.f32 %v799
  %v864 = vcvt.s32.f32 %v800
  %v865 = vcvt.s32.f32 %v801
  %v866 = vcvt.s32.f32 %v802
  %v867 = vcvt.s32.f32 %v803
  %v868 = vcvt.s32.f32 %v804
  %v869 = vcvt.s32.f32 %v805
  %v870 = vcvt.s32.f32 %v806
  %v871 = vcvt.s32.f32 %v807
  %v872 = vcvt.s32.f32 %v808
  %v873 = vcvt.s32.f32 %v809
  %v874 = vcvt.s32.f32 %v810
  %v875 = vcvt.s32.f32 %v811
  %v876 = vcvt.s32.f32 %v812
  %v877 = vcvt.s32.f32 %v813
  %v878 = vcvt.s32.f32 %v814
  %v879 = vcvt.s32.f32 %v815
  %v880 = vcvt.s32.f32 %v816
  %v881 = vcvt.s32.f32 %v817
  %v882 = vcvt.s32.f32 %v818
  %v883 = vcvt.s32.f32 %v819
  %v884 = vcvt.s32.f32 %v820
  %v885 = vcvt.s32.f32 %v821
  %v886 = vcvt.s32.f32 %v822
  %v887 = vcvt.s32.f32 %v823
  %v888 = vcvt.s32.f32 %v824
  %v889 = vcvt.s32.f32 %v825
  %v890 = vcvt.s32.f32 %v826
  %v891 = vcvt.s32.f32 %v827
  %v892 = vcvt.s32.f32 %v828
  %v893 = vcvt.s32.f32 %v829
  %v894 = vcvt.s32.f32 %v830
  %v895 = vcvt.s32.f32 %v831
  %v896 = vcvt.s32.f32 %v832
  %v897 = vmul.f32 %v351, %v833
  %v898 = vmul.f32 %v353, %v834
  %v899 = vmul.f32 %v356, %v835
  %v900 = vmul.f32 %v358, %v836
  %v901 = vmul.f32 %v361, %v837
  %v902 = vmul.f32 %v363, %v838
  %v903 = vmul.f32 %v366, %v839
  %v904 = vmul.f32 %v368, %v840
  %v905 = vmul.f32 %v371, %v841
  %v906 = vmul.f32 %v373, %v842
  %v907 = vmul.f32 %v376, %v843
  %v908 = vmul.f32 %v378, %v844
  %v909 = vmul.f32 %v381, %v845
  %v910 = vmul.f32 %v383, %v846
  %v911 = vmul.f32 %v386, %v847
  %v912 = vmul.f32 %v388, %v848
  %v913 = vmul.f32 %v391, %v849
  %v914 = vmul.f32 %v393, %v850
  %v915 = vmul.f32 %v396, %v851
  %v916 = vmul.f32 %v398, %v852
  %v917 = vmul.f32 %v401, %v853
  %v918 = vmul.f32 %v403, %v854
  %v919 = vmul.f32 %v406, %v855
  %v920 = vmul.f32 %v408, %v856
  %v921 = vmul.f32 %v411, %v857
  %v922 = vmul.f32 %v413, %v858
  %v923 = vmul.f32 %v416, %v859
  %v924 = vmul.f32 %v418, %v860
  %v925 = vmul.f32 %v421, %v861
  %v926 = vmul.f32 %v423, %v862
  %v927 = vmul.f32 %v426, %v863
  %v928 = vmul.f32 %v428, %v864
  %v929 = vmul.f32 %v431, %v865
  %v930 = vmul.f32 %v433, %v866
  %v931 = vmul.f32 %v436, %v867
  %v932 = vmul.f32 %v438, %v868
  %v933 = vmul.f32 %v441, %v869
  %v934 = vmul.f32 %v443, %v870
  %v935 = vmul.f32 %v446, %v871
  %v936 = vmul.f32 %v448, %v872
  %v937 = vmul.f32 %v451, %v873
  %v938 = vmul.f32 %v453, %v874
  %v939 = vmul.f32 %v456, %v875
  %v940 = vmul.f32 %v458, %v876
  %v941 = vmul.f32 %v461, %v877
  %v942 = vmul.f32 %v463, %v878
  %v943 = vmul.f32 %v466, %v879
  %v944 = vmul.f32 %v468, %v880
  %v945 = vmul.f32 %v471, %v881
  %v946 = vmul.f32 %v473, %v882
  %v947 = vmul.f32 %v476, %v883
  %v948 = vmul.f32 %v478, %v884
  %v949 = vmul.f32 %v481, %v885
  %v950 = vmul.f32 %v483, %v886
  %v951 = vmul.f32 %v486, %v887
  %v952 = vmul.f32 %v488, %v888
  %v953 = vmul.f32 %v491, %v889
  %v954 = vmul.f32 %v493, %v890
  %v955 = vmul.f32 %v496, %v891
  %v956 = vmul.f32 %v498, %v892
  %v957 = vmul.f32 %v501, %v893
  %v958 = vmul.f32 %v503, %v894
  %v959 = vmul.f32 %v506, %v895
  %v960 = vmul.f32 %v508, %v896
  %v961 = vadd.f32 %v897, %v898
  %v962 = vadd.f32 %v961, %v899
  %v963 = vadd.f32 %v962, %v900
  %v964 = vadd.f32 %v963, %v901
  %v965 = vadd.f32 %v964, %v902
  %v966 = vadd.f32 %v965, %v903
  %v967 = vadd.f32 %v966, %v904
  %v968 = vadd.f32 %v967, %v905
  %v969 = vadd.f32 %v968, %v906
  %v970 = vadd.f32 %v969, %v907
  %v971 = vadd.f32 %v970, %v908
  %v972 = vadd.f32 %v971, %v909
  %v973 = vadd.f32 %v972, %v910
  %v974 = vadd.f32 %v973, %v911
  %v975 = vadd.f32 %v974, %v912
  %v976 = vadd.f32 %v975, %v913
  %v977 = vadd.f32 %v976, %v914
  %v978 = vadd.f32 %v977, %v915
  %v979 = vadd.f32 %v978, %v916
  %v980 = vadd.f32 %v979, %v917
  %v981 = vadd.f32 %v980, %v918
  %v982 = vadd.f32 %v981, %v919
  %v983 = vadd.f32 %v982, %v920
  %v984 = vadd.f32 %v983, %v921
  %v985 = vadd.f32 %v984, %v922
  %v986 = vadd.f32 %v985, %v923
  %v987 = vadd.f32 %v986, %v924
  %v988 = vadd.f32 %v987, %v925
  %v989 = vadd.f32 %v988, %v926
  %v990 = vadd.f32 %v989, %v927
  %v991 = vadd.f32 %v990, %v928
  %v992 = vadd.f32 %v991, %v929
  %v993 = vadd.f32 %v992, %v930
  %v994 = vadd.f32 %v993, %v931
  %v995 = vadd.f32 %v994, %v932
  %v996 = vadd.f32 %v995, %v933
  %v997 = vadd.f32 %v996, %v934
  %v998 = vadd.f32 %v997, %v935
  %v999 = vadd.f32 %v998, %v936
  %v1000 = vadd.f32 %v999, %v937
  %v1001 = vadd.f32 %v1000, %v938
  %v1002 = vadd.f32 %v1001, %v939
  %v1003 = vadd.f32 %v1002, %v940
  %v1004 = vadd.f32 %v1003, %v941
  %v1005 = vadd.f32 %v1004, %v942
  %v1006 = vadd.f32 %v1005, %v943
  %v1007 = vadd.f32 %v1006, %v944
  %v1008 = vadd.f32 %v1007, %v945
  %v1009 = vadd.f32 %v1008, %v946
  %v1010 = vadd.f32 %v1009, %v947
  %v1011 = vadd.f32 %v1010, %v948
  %v1012 = vadd.f32 %v1011, %v949
  %v1013 = vadd.f32 %v1012, %v950
  %v1014 = vadd.f32 %v1013, %v951
  %v1015 = vadd.f32 %v1014, %v952
  %v1016 = vadd.f32 %v1015, %v953
  %v1017 = vadd.f32 %v1016, %v954
  %v1018 = vadd.f32 %v1017, %v955
  %v1019 = vadd.f32 %v1018, %v956
  %v1020 = vadd.f32 %v1019, %v957
  %v1021 = vadd.f32 %v1020, %v958
  %v1022 = vadd.f32 %v1021, %v959
  %v1023 = vadd.f32 %v1022, %v960
  %v1024 = vrot.slane %v1023, 4
  %v1025 = vadd.f32 %v1023, %v1024
  %v1026 = vrot.slane %v1025, 2
  %v1027 = vadd.f32 %v1025, %v1026
  %v1028 = vrot.slane %v1027, 1
  %v1029 = vadd.f32 %v1027, %v1028
  %v1030 = vmul.f32 %v897, %v351
  %v1031 = vmul.f32 %v898, %v353
  %v1032 = vmul.f32 %v899, %v356
  %v1033 = vmul.f32 %v900, %v358
  %v1034 = vmul.f32 %v901, %v361
  %v1035 = vmul.f32 %v902, %v363
  %v1036 = vmul.f32 %v903, %v366
  %v1037 = vmul.f32 %v904, %v368
  %v1038 = vmul.f32 %v905, %v371
  %v1039 = vmul.f32 %v906, %v373
  %v1040 = vmul.f32 %v907, %v376
  %v1041 = vmul.f32 %v908, %v378
  %v1042 = vmul.f32 %v909, %v381
  %v1043 = vmul.f32 %v910, %v383
  %v1044 = vmul.f32 %v911, %v386
  %v1045 = vmul.f32 %v912, %v388
  %v1046 = vmul.f32 %v913, %v391
  %v1047 = vmul.f32 %v914, %v393
  %v1048 = vmul.f32 %v915, %v396
  %v1049 = vmul.f32 %v916, %v398
  %v1050 = vmul.f32 %v917, %v401
  %v1051 = vmul.f32 %v918, %v403
  %v1052 = vmul.f32 %v919, %v406
  %v1053 = vmul.f32 %v920, %v408
  %v1054 = vmul.f32 %v921, %v411
  %v1055 = vmul.f32 %v922, %v413
  %v1056 = vmul.f32 %v923, %v416
  %v1057 = vmul.f32 %v924, %v418
  %v1058 = vmul.f32 %v925, %v421
  %v1059 = vmul.f32 %v926, %v423
  %v1060 = vmul.f32 %v927, %v426
  %v1061 = vmul.f32 %v928, %v428
  %v1062 = vmul.f32 %v929, %v431
  %v1063 = vmul.f32 %v930, %v433
  %v1064 = vmul.f32 %v931, %v436
  %v1065 = vmul.f32 %v932, %v438
  %v1066 = vmul.f32 %v933, %v441
  %v1067 = vmul.f32 %v934, %v443
  %v1068 = vmul.f32 %v935, %v446
  %v1069 = vmul.f32 %v936, %v448
  %v1070 = vmul.f32 %v937, %v451
  %v1071 = vmul.f32 %v938, %v453
  %v1072 = vmul.f32 %v939, %v456
  %v1073 = vmul.f32 %v940, %v458
  %v1074 = vmul.f32 %v941, %v461
  %v1075 = vmul.f32 %v942, %v463
  %v1076 = vmul.f32 %v943, %v466
  %v1077 = vmul.f32 %v944, %v468
  %v1078 = vmul.f32 %v945, %v471
  %v1079 = vmul.f32 %v946, %v473
  %v1080 = vmul.f32 %v947, %v476
  %v1081 = vmul.f32 %v948, %v478
  %v1082 = vmul.f32 %v949, %v481
  %v1083 = vmul.f32 %v950, %v483
  %v1084 = vmul.f32 %v951, %v486
  %v1085 = vmul.f32 %v952, %v488
  %v1086 = vmul.f32 %v953, %v491
  %v1087 = vmul.f32 %v954, %v493
  %v1088 = vmul.f32 %v955, %v496
  %v1089 = vmul.f32 %v956, %v498
  %v1090 = vmul.f32 %v957, %v501
  %v1091 = vmul.f32 %v958, %v503
  %v1092 = vmul.f32 %v959, %v506
  %v1093 = vmul.f32 %v960, %v508
  %v1094 = vadd.f32 %v1030, %v1031
  %v1095 = vadd.f32 %v1094, %v1032
  %v1096 = vadd.f32 %v1095, %v1033
  %v1097 = vadd.f32 %v1096, %v1034
  %v1098 = vadd.f32 %v1097, %v1035
  %v1099 = vadd.f32 %v1098, %v1036
  %v1100 = vadd.f32 %v1099, %v1037
  %v1101 = vadd.f32 %v1100, %v1038
  %v1102 = vadd.f32 %v1101, %v1039
  %v1103 = vadd.f32 %v1102, %v1040
  %v1104 = vadd.f32 %v1103, %v1041
  %v1105 = vadd.f32 %v1104, %v1042
  %v1106 = vadd.f32 %v1105, %v1043
  %v1107 = vadd.f32 %v1106, %v1044
  %v1108 = vadd.f32 %v1107, %v1045
  %v1109 = vadd.f32 %v1108, %v1046
  %v1110 = vadd.f32 %v1109, %v1047
  %v1111 = vadd.f32 %v1110, %v1048
  %v1112 = vadd.f32 %v1111, %v1049
  %v1113 = vadd.f32 %v1112, %v1050
  %v1114 = vadd.f32 %v1113, %v1051
  %v1115 = vadd.f32 %v1114, %v1052
  %v1116 = vadd.f32 %v1115, %v1053
  %v1117 = vadd.f32 %v1116, %v1054
  %v1118 = vadd.f32 %v1117, %v1055
  %v1119 = vadd.f32 %v1118, %v1056
  %v1120 = vadd.f32 %v1119, %v1057
  %v1121 = vadd.f32 %v1120, %v1058
  %v1122 = vadd.f32 %v1121, %v1059
  %v1123 = vadd.f32 %v1122, %v1060
  %v1124 = vadd.f32 %v1123, %v1061
  %v1125 = vadd.f32 %v1124, %v1062
  %v1126 = vadd.f32 %v1125, %v1063
  %v1127 = vadd.f32 %v1126, %v1064
  %v1128 = vadd.f32 %v1127, %v1065
  %v1129 = vadd.f32 %v1128, %v1066
  %v1130 = vadd.f32 %v1129, %v1067
  %v1131 = vadd.f32 %v1130, %v1068
  %v1132 = vadd.f32 %v1131, %v1069
  %v1133 = vadd.f32 %v1132, %v1070
  %v1134 = vadd.f32 %v1133, %v1071
  %v1135 = vadd.f32 %v1134, %v1072
  %v1136 = vadd.f32 %v1135, %v1073
  %v1137 = vadd.f32 %v1136, %v1074
  %v1138 = vadd.f32 %v1137, %v1075
  %v1139 = vadd.f32 %v1138, %v1076
  %v1140 = vadd.f32 %v1139, %v1077
  %v1141 = vadd.f32 %v1140, %v1078
  %v1142 = vadd.f32 %v1141, %v1079
  %v1143 = vadd.f32 %v1142, %v1080
  %v1144 = vadd.f32 %v1143, %v1081
  %v1145 = vadd.f32 %v1144, %v1082
  %v1146 = vadd.f32 %v1145, %v1083
  %v1147 = vadd.f32 %v1146, %v1084
  %v1148 = vadd.f32 %v1147, %v1085
  %v1149 = vadd.f32 %v1148, %v1086
  %v1150 = vadd.f32 %v1149, %v1087
  %v1151 = vadd.f32 %v1150, %v1088
  %v1152 = vadd.f32 %v1151, %v1089
  %v1153 = vadd.f32 %v1152, %v1090
  %v1154 = vadd.f32 %v1153, %v1091
  %v1155 = vadd.f32 %v1154, %v1092
  %v1156 = vadd.f32 %v1155, %v1093
  %v1157 = vrot.slane %v1156, 4
  %v1158 = vadd.f32 %v1156, %v1157
  %v1159 = vrot.slane %v1158, 2
  %v1160 = vadd.f32 %v1158, %v1159
  %v1161 = vrot.slane %v1160, 1
  %v1162 = vadd.f32 %v1160, %v1161
  %1163 = vst [vmem:[%s4] sm:$0xff] %v1029
  %1164 = vst [vmem:[%s5] sm:$0xff] %v1162
  // Predicated region
  $region14: #{basic_conv2d.2} parent=0 // pred_check
    _
  $region15: #{basic_conv2d.2} parent=0 // pred_check_branch
    %1166 = sbr.rel (0) target = $region17
  $region16: #{basic_conv2d.2} parent=0 // pred_region
    _
  $region17: #{basic_conv2d.2} parent=0 // pred_fallthru
    _
  // Predicated region
  $region18: #{basic_conv2d.2} parent=0 // pred_check
    _
  $region19: #{basic_conv2d.2} parent=0 // pred_check_branch
    %1168 = sbr.rel (0) target = $region21
  $region20: #{basic_conv2d.2} parent=0 // pred_region
    _
  $region21: #{basic_conv2d.2} parent=0 // pred_fallthru
    _
  // Predicated region
  $region22: #{basic_conv2d.2} parent=0 // pred_check
    _
  $region23: #{basic_conv2d.2} parent=0 // pred_check_branch
    %1170 = sbr.rel (0) target = $region25
  $region24: #{basic_conv2d.2} parent=0 // pred_region
    _
  $region25: #{basic_conv2d.2} parent=0 // pred_fallthru
    _
  // Predicated region
  $region26: #{basic_conv2d.2} parent=0 // pred_check
    _
  $region27: #{basic_conv2d.2} parent=0 // pred_check_branch
    %1172 = sbr.rel (0) target = $region29
  $region28: #{basic_conv2d.2} parent=0 // pred_region
    _
  $region29: #{basic_conv2d.2} parent=0 // pred_fallthru
    _
  // Predicated region
  $region30: #{basic_conv2d.2} parent=0 // pred_check
    _
  $region31: #{basic_conv2d.2} parent=0 // pred_check_branch
    %1174 = sbr.rel (0) target = $region33
  $region32: #{basic_conv2d.2} parent=0 // pred_region
    _
  $region33: #{basic_conv2d.2} parent=0 // pred_fallthru
    _
  // Predicated region
  $region34: #{basic_conv2d.2} parent=0 // pred_check
    _
  $region35: #{basic_conv2d.2} parent=0 // pred_check_branch
    %1176 = sbr.rel (0) target = $region37
  $region36: #{basic_conv2d.2} parent=0 // pred_region
    _
  $region37: #{basic_conv2d.2} parent=0 // pred_fallthru
    _

</llo_original>
